<compile_context>
chip_gen: v7x
topology: tpu7x:2x2x1
jax: 0.10.0
libtpu: 0.0.40
codegen_flags: <defaults>
</compile_context>

<pallas_src>
import math

import jax
import jax.numpy as jnp
from jax.experimental import pallas as pl
from jax.experimental.pallas import tpu as pltpu

# ---- model config (small, consistent with the module's forward) ----
B = 2          # batch
S = 8          # seq_len
D = 32         # d_model
H = 4          # num_heads
DH = D // H    # head dim
DFF = 64       # d_ff
EPS = 1e-5     # LayerNorm eps (PyTorch default)
N = B * S      # flattened token count


def encoder_layer_kernel(
    x_ref,          # (N, D)       flattened activations
    wqkv_ref,       # (D, 3D)      [Wq | Wk | Wv]
    wo_ref,         # (D, D)
    w1_ref,         # (D, DFF)
    w2_ref,         # (DFF, D)
    bias_ref,       # (1, 3D + D + DFF + D)  [bq|bk|bv | bo | b1 | b2]
    ln_ref,         # (4, D)       rows: gamma1, beta1, gamma2, beta2
    out_ref,        # (N, D)
    attn_ref,       # (N, H*N)     per-head softmax matrices, lane-concatenated
):
    x = x_ref[...].astype(jnp.float32)                               # (N, D)

    # ---- unpack packed params (static lane / sublane slices, cheap) ----
    b_qkv = bias_ref[:, 0:3 * D]                                     # (1, 3D)
    b_o = bias_ref[:, 3 * D:4 * D]                                   # (1, D)
    b_1 = bias_ref[:, 4 * D:4 * D + DFF]                             # (1, DFF)
    b_2 = bias_ref[:, 4 * D + DFF:4 * D + DFF + D]                   # (1, D)
    g1, be1 = ln_ref[0:1, :], ln_ref[1:2, :]
    g2, be2 = ln_ref[2:3, :], ln_ref[3:4, :]

    # ---------------- LayerNorm 1 (pre-LN) ----------------
    mu = jnp.mean(x, axis=-1, keepdims=True)
    var = jnp.mean((x - mu) * (x - mu), axis=-1, keepdims=True)
    nx = (x - mu) * jax.lax.rsqrt(var + EPS) * g1 + be1              # (N, D)

    # ---------------- fused QKV projection (one MXU push) ----------------
    qkv = jnp.dot(nx, wqkv_ref[...], preferred_element_type=jnp.float32) + b_qkv
    q = qkv[:, 0:D] * (1.0 / math.sqrt(DH))     # fold softmax scale into q once
    k = qkv[:, D:2 * D]
    v = qkv[:, 2 * D:3 * D]

    # Additive block-diagonal mask: tokens from different batch elements get
    # -inf so one (N, N) score matrix per head covers the whole batch.
    # (float path instead of integer divide; exact for these small indices)
    r = jax.lax.broadcasted_iota(jnp.int32, (N, N), 0)
    c = jax.lax.broadcasted_iota(jnp.int32, (N, N), 1)
    rb = jnp.floor(r.astype(jnp.float32) * (1.0 / S))
    cb = jnp.floor(c.astype(jnp.float32) * (1.0 / S))
    neg_mask = jnp.where(rb == cb, 0.0, -1e30).astype(jnp.float32)   # (N, N)

    o_heads = []
    p_heads = []
    for h in range(H):                                               # static loop
        lo, hi = h * DH, (h + 1) * DH
        qh, kh, vh = q[:, lo:hi], k[:, lo:hi], v[:, lo:hi]           # (N, DH)
        s = jax.lax.dot_general(qh, kh, (((1,), (1,)), ((), ())),
                                preferred_element_type=jnp.float32)  # (N, N)
        s = s + neg_mask
        m = jnp.max(s, axis=-1, keepdims=True)
        p = jnp.exp(s - m)
        p = p * pl.reciprocal(jnp.sum(p, axis=-1, keepdims=True), approx=False)
        p_heads.append(p)
        o_heads.append(jnp.dot(p, vh, preferred_element_type=jnp.float32))  # (N, DH)

    # single output projection on concatenated heads
    o_cat = jnp.concatenate(o_heads, axis=-1)                        # (N, D)
    attn_out = jnp.dot(o_cat, wo_ref[...], preferred_element_type=jnp.float32) + b_o

    # residual (dropout1 is identity at inference)
    x = x + attn_out

    # ---------------- LayerNorm 2 ----------------
    mu2 = jnp.mean(x, axis=-1, keepdims=True)
    var2 = jnp.mean((x - mu2) * (x - mu2), axis=-1, keepdims=True)
    nx2 = (x - mu2) * jax.lax.rsqrt(var2 + EPS) * g2 + be2

    # ---------------- FeedForward: relu(x W1 + b1) W2 + b2 ----------------
    h1 = jnp.dot(nx2, w1_ref[...], preferred_element_type=jnp.float32) + b_1
    h1 = jnp.maximum(h1, 0.0)
    ff = jnp.dot(h1, w2_ref[...], preferred_element_type=jnp.float32) + b_2

    # residual (dropout2 is identity at inference); single store each
    out_ref[...] = (x + ff).astype(out_ref.dtype)
    attn_ref[...] = jnp.concatenate(p_heads, axis=-1)                # (N, H*N)


@jax.jit
def encoder_layer(x, packed_params):
    """x: (B, S, D) float32 -> (out (B, S, D), attention (B, H, S, S))."""
    Bn, Sn, Dn = x.shape
    n = Bn * Sn
    x2d = x.reshape(n, Dn)                       # free, contiguous reshape

    vmem = pltpu.MemorySpace.VMEM
    out2d, attn_slab = pl.pallas_call(
        encoder_layer_kernel,
        out_shape=(
            jax.ShapeDtypeStruct((n, Dn), jnp.float32),
            jax.ShapeDtypeStruct((n, H * n), jnp.float32),
        ),
        in_specs=[pl.BlockSpec(memory_space=vmem)] * 7,
        out_specs=(pl.BlockSpec(memory_space=vmem),
                   pl.BlockSpec(memory_space=vmem)),
    )(x2d, *packed_params)

    out = out2d.reshape(Bn, Sn, Dn)

    # attn_slab[b*S + s, h*N + b*S + t] == attention[b, h, s, t]
    a = attn_slab.reshape(Bn, Sn, H, Bn, Sn)
    idx = jnp.arange(Bn)
    a = a[idx, :, :, idx, :]                     # (B, S, H, S): batch-diagonal blocks
    attn = jnp.transpose(a, (0, 2, 1, 3))        # (B, H, S, S)
    return out, attn


def init_params(key, init_std=0.02):
    """Mirrors init_weights(module, init_std=0.02): Linear weights ~ N(0, 0.02),
    biases = 0, LayerNorm gamma = 1, beta = 0. Returns packed parameter slabs."""
    ks = jax.random.split(key, 6)
    wq = jax.random.normal(ks[0], (D, D), jnp.float32) * init_std
    wk = jax.random.normal(ks[1], (D, D), jnp.float32) * init_std
    wv = jax.random.normal(ks[2], (D, D), jnp.float32) * init_std
    wo = jax.random.normal(ks[3], (D, D), jnp.float32) * init_std
    w1 = jax.random.normal(ks[4], (D, DFF), jnp.float32) * init_std
    w2 = jax.random.normal(ks[5], (DFF, D), jnp.float32) * init_std

    wqkv = jnp.concatenate([wq, wk, wv], axis=1)                     # (D, 3D)
    # biases: [bq | bk | bv | bo | b1 | b2], all zero at init
    bias = jnp.zeros((1, 3 * D + D + DFF + D), jnp.float32)          # (1, 224)
    # LayerNorm params: rows gamma1, beta1, gamma2, beta2
    ln = jnp.concatenate(
        [jnp.ones((1, D), jnp.float32), jnp.zeros((1, D), jnp.float32),
         jnp.ones((1, D), jnp.float32), jnp.zeros((1, D), jnp.float32)], axis=0)
    return (wqkv, wo, w1, w2, bias, ln)


if __name__ == "__main__":
    key = jax.random.PRNGKey(0)
    k_x, k_p = jax.random.split(key)
    x = jax.random.normal(k_x, (B, S, D), jnp.float32)
    params = init_params(k_p)

    out, attn = encoder_layer(x, params)
    jax.block_until_ready((out, attn))

    assert out.shape == (B, S, D)
    assert attn.shape == (B, H, S, S)
    print("KERNEL_OK")
</pallas_src>

<mosaic_0001>
module attributes {stable_mosaic.version = 11 : i64} {
  func.func @encoder_layer_kernel(%arg0: memref<16x32xf32, #tpu.memory_space<vmem>>, %arg1: memref<32x96xf32, #tpu.memory_space<vmem>>, %arg2: memref<32x32xf32, #tpu.memory_space<vmem>>, %arg3: memref<32x64xf32, #tpu.memory_space<vmem>>, %arg4: memref<64x32xf32, #tpu.memory_space<vmem>>, %arg5: memref<1x224xf32, #tpu.memory_space<vmem>>, %arg6: memref<4x32xf32, #tpu.memory_space<vmem>>, %arg7: memref<16x32xf32, #tpu.memory_space<vmem>>, %arg8: memref<16x64xf32, #tpu.memory_space<vmem>>) attributes {dimension_semantics = [], scalar_prefetch = 0 : i64, scratch_operands = 0 : i64, tpu.core_type = #tpu.core_type<tc>} {
    %c0 = arith.constant 0 : index
    %c0_0 = arith.constant 0 : index
    %0 = vector.load %arg0[%c0, %c0_0] : memref<16x32xf32, #tpu.memory_space<vmem>>, vector<16x32xf32>
    %c0_1 = arith.constant 0 : index
    %c0_2 = arith.constant 0 : index
    %1 = vector.load %arg5[%c0_1, %c0_2] : memref<1x224xf32, #tpu.memory_space<vmem>>, vector<1x96xf32>
    %c0_3 = arith.constant 0 : index
    %c96 = arith.constant 96 : index
    %2 = vector.load %arg5[%c0_3, %c96] : memref<1x224xf32, #tpu.memory_space<vmem>>, vector<1x32xf32>
    %c0_4 = arith.constant 0 : index
    %c128 = arith.constant 128 : index
    %3 = vector.load %arg5[%c0_4, %c128] : memref<1x224xf32, #tpu.memory_space<vmem>>, vector<1x64xf32>
    %c0_5 = arith.constant 0 : index
    %c192 = arith.constant 192 : index
    %4 = vector.load %arg5[%c0_5, %c192] : memref<1x224xf32, #tpu.memory_space<vmem>>, vector<1x32xf32>
    %c0_6 = arith.constant 0 : index
    %c0_7 = arith.constant 0 : index
    %5 = vector.load %arg6[%c0_6, %c0_7] : memref<4x32xf32, #tpu.memory_space<vmem>>, vector<1x32xf32>
    %c1 = arith.constant 1 : index
    %c0_8 = arith.constant 0 : index
    %6 = vector.load %arg6[%c1, %c0_8] : memref<4x32xf32, #tpu.memory_space<vmem>>, vector<1x32xf32>
    %c2 = arith.constant 2 : index
    %c0_9 = arith.constant 0 : index
    %7 = vector.load %arg6[%c2, %c0_9] : memref<4x32xf32, #tpu.memory_space<vmem>>, vector<1x32xf32>
    %c3 = arith.constant 3 : index
    %c0_10 = arith.constant 0 : index
    %8 = vector.load %arg6[%c3, %c0_10] : memref<4x32xf32, #tpu.memory_space<vmem>>, vector<1x32xf32>
    %cst = arith.constant dense<0.000000e+00> : vector<16xf32>
    %9 = vector.multi_reduction <add>, %0, %cst [1] : vector<16x32xf32> to vector<16xf32>
    %10 = vector.shape_cast %9 : vector<16xf32> to vector<16x1xf32>
    %cst_11 = arith.constant 3.200000e+01 : f32
    %11 = vector.broadcast %cst_11 : f32 to vector<16x1xf32>
    %12 = arith.divf %10, %11 : vector<16x1xf32>
    %13 = vector.broadcast %12 : vector<16x1xf32> to vector<16x32xf32>
    %14 = arith.subf %0, %13 : vector<16x32xf32>
    %15 = vector.broadcast %12 : vector<16x1xf32> to vector<16x32xf32>
    %16 = arith.subf %0, %15 : vector<16x32xf32>
    %17 = arith.mulf %14, %16 : vector<16x32xf32>
    %cst_12 = arith.constant dense<0.000000e+00> : vector<16xf32>
    %18 = vector.multi_reduction <add>, %17, %cst_12 [1] : vector<16x32xf32> to vector<16xf32>
    %19 = vector.shape_cast %18 : vector<16xf32> to vector<16x1xf32>
    %cst_13 = arith.constant 3.200000e+01 : f32
    %20 = vector.broadcast %cst_13 : f32 to vector<16x1xf32>
    %21 = arith.divf %19, %20 : vector<16x1xf32>
    %22 = vector.broadcast %12 : vector<16x1xf32> to vector<16x32xf32>
    %23 = arith.subf %0, %22 : vector<16x32xf32>
    %cst_14 = arith.constant 9.99999974E-6 : f32
    %24 = vector.broadcast %cst_14 : f32 to vector<16x1xf32>
    %25 = arith.addf %21, %24 : vector<16x1xf32>
    %26 = math.rsqrt %25 : vector<16x1xf32>
    %27 = vector.broadcast %26 : vector<16x1xf32> to vector<16x32xf32>
    %28 = arith.mulf %23, %27 : vector<16x32xf32>
    %29 = vector.broadcast %5 : vector<1x32xf32> to vector<16x32xf32>
    %30 = arith.mulf %28, %29 : vector<16x32xf32>
    %31 = vector.broadcast %6 : vector<1x32xf32> to vector<16x32xf32>
    %32 = arith.addf %30, %31 : vector<16x32xf32>
    %c0_15 = arith.constant 0 : index
    %c0_16 = arith.constant 0 : index
    %33 = vector.load %arg1[%c0_15, %c0_16] : memref<32x96xf32, #tpu.memory_space<vmem>>, vector<32x96xf32>
    %cst_17 = arith.constant dense<0.000000e+00> : vector<16x96xf32>
    %34 = tpu.matmul %32, %33, %cst_17 {dimension_numbers = #tpu.dot_dimension_numbers<[1], [0], [0], [1], [0, 0, 1, 1], [], []>} : vector<16x32xf32>, vector<32x96xf32>, vector<16x96xf32> -> vector<16x96xf32>
    %35 = vector.broadcast %1 : vector<1x96xf32> to vector<16x96xf32>
    %36 = arith.addf %34, %35 : vector<16x96xf32>
    %37 = vector.extract_strided_slice %36 {offsets = [0, 0], sizes = [16, 32], strides = [1, 1]} : vector<16x96xf32> to vector<16x32xf32>
    %cst_18 = arith.constant 0.353553385 : f32
    %38 = vector.broadcast %cst_18 : f32 to vector<16x32xf32>
    %39 = arith.mulf %37, %38 : vector<16x32xf32>
    %40 = vector.extract_strided_slice %36 {offsets = [0, 32], sizes = [16, 32], strides = [1, 1]} : vector<16x96xf32> to vector<16x32xf32>
    %41 = vector.extract_strided_slice %36 {offsets = [0, 64], sizes = [16, 32], strides = [1, 1]} : vector<16x96xf32> to vector<16x32xf32>
    %42 = tpu.iota {dimensions = array<i32: 0>} : vector<16x16xi32>
    %43 = tpu.iota {dimensions = array<i32: 1>} : vector<16x16xi32>
    %44 = arith.sitofp %42 : vector<16x16xi32> to vector<16x16xf32>
    %cst_19 = arith.constant 1.250000e-01 : f32
    %45 = vector.broadcast %cst_19 : f32 to vector<16x16xf32>
    %46 = arith.mulf %44, %45 : vector<16x16xf32>
    %47 = math.floor %46 : vector<16x16xf32>
    %48 = arith.sitofp %43 : vector<16x16xi32> to vector<16x16xf32>
    %cst_20 = arith.constant 1.250000e-01 : f32
    %49 = vector.broadcast %cst_20 : f32 to vector<16x16xf32>
    %50 = arith.mulf %48, %49 : vector<16x16xf32>
    %51 = math.floor %50 : vector<16x16xf32>
    %52 = arith.cmpf oeq, %47, %51 : vector<16x16xf32>
    %cst_21 = arith.constant 0.000000e+00 : f32
    %cst_22 = arith.constant -1.000000e+30 : f32
    %53 = vector.broadcast %cst_21 : f32 to vector<16x16xf32>
    %54 = vector.broadcast %cst_22 : f32 to vector<16x16xf32>
    %55 = arith.select %52, %53, %54 : vector<16x16xi1>, vector<16x16xf32>
    %56 = vector.extract_strided_slice %39 {offsets = [0, 0], sizes = [16, 8], strides = [1, 1]} : vector<16x32xf32> to vector<16x8xf32>
    %57 = vector.extract_strided_slice %40 {offsets = [0, 0], sizes = [16, 8], strides = [1, 1]} : vector<16x32xf32> to vector<16x8xf32>
    %58 = vector.extract_strided_slice %41 {offsets = [0, 0], sizes = [16, 8], strides = [1, 1]} : vector<16x32xf32> to vector<16x8xf32>
    %cst_23 = arith.constant dense<0.000000e+00> : vector<16x16xf32>
    %59 = tpu.matmul %56, %57, %cst_23 {dimension_numbers = #tpu.dot_dimension_numbers<[1], [1], [0], [0], [0, 0, 1, 0], [], []>} : vector<16x8xf32>, vector<16x8xf32>, vector<16x16xf32> -> vector<16x16xf32>
    %60 = arith.addf %59, %55 : vector<16x16xf32>
    %cst_24 = arith.constant dense<0xFF800000> : vector<16xf32>
    %61 = vector.multi_reduction <maximumf>, %60, %cst_24 [1] : vector<16x16xf32> to vector<16xf32>
    %62 = vector.shape_cast %61 : vector<16xf32> to vector<16x1xf32>
    %63 = vector.broadcast %62 : vector<16x1xf32> to vector<16x16xf32>
    %64 = arith.subf %60, %63 : vector<16x16xf32>
    %65 = math.exp %64 : vector<16x16xf32>
    %cst_25 = arith.constant dense<0.000000e+00> : vector<16xf32>
    %66 = vector.multi_reduction <add>, %65, %cst_25 [1] : vector<16x16xf32> to vector<16xf32>
    %67 = vector.shape_cast %66 : vector<16xf32> to vector<16x1xf32>
    %68 = tpu.reciprocal %67 : vector<16x1xf32> -> vector<16x1xf32>
    %69 = vector.broadcast %68 : vector<16x1xf32> to vector<16x16xf32>
    %70 = arith.mulf %65, %69 : vector<16x16xf32>
    %cst_26 = arith.constant dense<0.000000e+00> : vector<16x8xf32>
    %71 = tpu.matmul %70, %58, %cst_26 {dimension_numbers = #tpu.dot_dimension_numbers<[1], [0], [0], [1], [0, 0, 1, 1], [], []>} : vector<16x16xf32>, vector<16x8xf32>, vector<16x8xf32> -> vector<16x8xf32>
    %72 = vector.extract_strided_slice %39 {offsets = [0, 8], sizes = [16, 8], strides = [1, 1]} : vector<16x32xf32> to vector<16x8xf32>
    %73 = vector.extract_strided_slice %40 {offsets = [0, 8], sizes = [16, 8], strides = [1, 1]} : vector<16x32xf32> to vector<16x8xf32>
    %74 = vector.extract_strided_slice %41 {offsets = [0, 8], sizes = [16, 8], strides = [1, 1]} : vector<16x32xf32> to vector<16x8xf32>
    %cst_27 = arith.constant dense<0.000000e+00> : vector<16x16xf32>
    %75 = tpu.matmul %72, %73, %cst_27 {dimension_numbers = #tpu.dot_dimension_numbers<[1], [1], [0], [0], [0, 0, 1, 0], [], []>} : vector<16x8xf32>, vector<16x8xf32>, vector<16x16xf32> -> vector<16x16xf32>
    %76 = arith.addf %75, %55 : vector<16x16xf32>
    %cst_28 = arith.constant dense<0xFF800000> : vector<16xf32>
    %77 = vector.multi_reduction <maximumf>, %76, %cst_28 [1] : vector<16x16xf32> to vector<16xf32>
    %78 = vector.shape_cast %77 : vector<16xf32> to vector<16x1xf32>
    %79 = vector.broadcast %78 : vector<16x1xf32> to vector<16x16xf32>
    %80 = arith.subf %76, %79 : vector<16x16xf32>
    %81 = math.exp %80 : vector<16x16xf32>
    %cst_29 = arith.constant dense<0.000000e+00> : vector<16xf32>
    %82 = vector.multi_reduction <add>, %81, %cst_29 [1] : vector<16x16xf32> to vector<16xf32>
    %83 = vector.shape_cast %82 : vector<16xf32> to vector<16x1xf32>
    %84 = tpu.reciprocal %83 : vector<16x1xf32> -> vector<16x1xf32>
    %85 = vector.broadcast %84 : vector<16x1xf32> to vector<16x16xf32>
    %86 = arith.mulf %81, %85 : vector<16x16xf32>
    %cst_30 = arith.constant dense<0.000000e+00> : vector<16x8xf32>
    %87 = tpu.matmul %86, %74, %cst_30 {dimension_numbers = #tpu.dot_dimension_numbers<[1], [0], [0], [1], [0, 0, 1, 1], [], []>} : vector<16x16xf32>, vector<16x8xf32>, vector<16x8xf32> -> vector<16x8xf32>
    %88 = vector.extract_strided_slice %39 {offsets = [0, 16], sizes = [16, 8], strides = [1, 1]} : vector<16x32xf32> to vector<16x8xf32>
    %89 = vector.extract_strided_slice %40 {offsets = [0, 16], sizes = [16, 8], strides = [1, 1]} : vector<16x32xf32> to vector<16x8xf32>
    %90 = vector.extract_strided_slice %41 {offsets = [0, 16], sizes = [16, 8], strides = [1, 1]} : vector<16x32xf32> to vector<16x8xf32>
    %cst_31 = arith.constant dense<0.000000e+00> : vector<16x16xf32>
    %91 = tpu.matmul %88, %89, %cst_31 {dimension_numbers = #tpu.dot_dimension_numbers<[1], [1], [0], [0], [0, 0, 1, 0], [], []>} : vector<16x8xf32>, vector<16x8xf32>, vector<16x16xf32> -> vector<16x16xf32>
    %92 = arith.addf %91, %55 : vector<16x16xf32>
    %cst_32 = arith.constant dense<0xFF800000> : vector<16xf32>
    %93 = vector.multi_reduction <maximumf>, %92, %cst_32 [1] : vector<16x16xf32> to vector<16xf32>
    %94 = vector.shape_cast %93 : vector<16xf32> to vector<16x1xf32>
    %95 = vector.broadcast %94 : vector<16x1xf32> to vector<16x16xf32>
    %96 = arith.subf %92, %95 : vector<16x16xf32>
    %97 = math.exp %96 : vector<16x16xf32>
    %cst_33 = arith.constant dense<0.000000e+00> : vector<16xf32>
    %98 = vector.multi_reduction <add>, %97, %cst_33 [1] : vector<16x16xf32> to vector<16xf32>
    %99 = vector.shape_cast %98 : vector<16xf32> to vector<16x1xf32>
    %100 = tpu.reciprocal %99 : vector<16x1xf32> -> vector<16x1xf32>
    %101 = vector.broadcast %100 : vector<16x1xf32> to vector<16x16xf32>
    %102 = arith.mulf %97, %101 : vector<16x16xf32>
    %cst_34 = arith.constant dense<0.000000e+00> : vector<16x8xf32>
    %103 = tpu.matmul %102, %90, %cst_34 {dimension_numbers = #tpu.dot_dimension_numbers<[1], [0], [0], [1], [0, 0, 1, 1], [], []>} : vector<16x16xf32>, vector<16x8xf32>, vector<16x8xf32> -> vector<16x8xf32>
    %104 = vector.extract_strided_slice %39 {offsets = [0, 24], sizes = [16, 8], strides = [1, 1]} : vector<16x32xf32> to vector<16x8xf32>
    %105 = vector.extract_strided_slice %40 {offsets = [0, 24], sizes = [16, 8], strides = [1, 1]} : vector<16x32xf32> to vector<16x8xf32>
    %106 = vector.extract_strided_slice %41 {offsets = [0, 24], sizes = [16, 8], strides = [1, 1]} : vector<16x32xf32> to vector<16x8xf32>
    %cst_35 = arith.constant dense<0.000000e+00> : vector<16x16xf32>
    %107 = tpu.matmul %104, %105, %cst_35 {dimension_numbers = #tpu.dot_dimension_numbers<[1], [1], [0], [0], [0, 0, 1, 0], [], []>} : vector<16x8xf32>, vector<16x8xf32>, vector<16x16xf32> -> vector<16x16xf32>
    %108 = arith.addf %107, %55 : vector<16x16xf32>
    %cst_36 = arith.constant dense<0xFF800000> : vector<16xf32>
    %109 = vector.multi_reduction <maximumf>, %108, %cst_36 [1] : vector<16x16xf32> to vector<16xf32>
    %110 = vector.shape_cast %109 : vector<16xf32> to vector<16x1xf32>
    %111 = vector.broadcast %110 : vector<16x1xf32> to vector<16x16xf32>
    %112 = arith.subf %108, %111 : vector<16x16xf32>
    %113 = math.exp %112 : vector<16x16xf32>
    %cst_37 = arith.constant dense<0.000000e+00> : vector<16xf32>
    %114 = vector.multi_reduction <add>, %113, %cst_37 [1] : vector<16x16xf32> to vector<16xf32>
    %115 = vector.shape_cast %114 : vector<16xf32> to vector<16x1xf32>
    %116 = tpu.reciprocal %115 : vector<16x1xf32> -> vector<16x1xf32>
    %117 = vector.broadcast %116 : vector<16x1xf32> to vector<16x16xf32>
    %118 = arith.mulf %113, %117 : vector<16x16xf32>
    %cst_38 = arith.constant dense<0.000000e+00> : vector<16x8xf32>
    %119 = tpu.matmul %118, %106, %cst_38 {dimension_numbers = #tpu.dot_dimension_numbers<[1], [0], [0], [1], [0, 0, 1, 1], [], []>} : vector<16x16xf32>, vector<16x8xf32>, vector<16x8xf32> -> vector<16x8xf32>
    %120 = tpu.concatenate %71, %87, %103, %119 in 1 : vector<16x8xf32>, vector<16x8xf32>, vector<16x8xf32>, vector<16x8xf32> -> vector<16x32xf32>
    %c0_39 = arith.constant 0 : index
    %c0_40 = arith.constant 0 : index
    %121 = vector.load %arg2[%c0_39, %c0_40] : memref<32x32xf32, #tpu.memory_space<vmem>>, vector<32x32xf32>
    %cst_41 = arith.constant dense<0.000000e+00> : vector<16x32xf32>
    %122 = tpu.matmul %120, %121, %cst_41 {dimension_numbers = #tpu.dot_dimension_numbers<[1], [0], [0], [1], [0, 0, 1, 1], [], []>} : vector<16x32xf32>, vector<32x32xf32>, vector<16x32xf32> -> vector<16x32xf32>
    %123 = vector.broadcast %2 : vector<1x32xf32> to vector<16x32xf32>
    %124 = arith.addf %122, %123 : vector<16x32xf32>
    %125 = arith.addf %0, %124 : vector<16x32xf32>
    %cst_42 = arith.constant dense<0.000000e+00> : vector<16xf32>
    %126 = vector.multi_reduction <add>, %125, %cst_42 [1] : vector<16x32xf32> to vector<16xf32>
    %127 = vector.shape_cast %126 : vector<16xf32> to vector<16x1xf32>
    %cst_43 = arith.constant 3.200000e+01 : f32
    %128 = vector.broadcast %cst_43 : f32 to vector<16x1xf32>
    %129 = arith.divf %127, %128 : vector<16x1xf32>
    %130 = vector.broadcast %129 : vector<16x1xf32> to vector<16x32xf32>
    %131 = arith.subf %125, %130 : vector<16x32xf32>
    %132 = vector.broadcast %129 : vector<16x1xf32> to vector<16x32xf32>
    %133 = arith.subf %125, %132 : vector<16x32xf32>
    %134 = arith.mulf %131, %133 : vector<16x32xf32>
    %cst_44 = arith.constant dense<0.000000e+00> : vector<16xf32>
    %135 = vector.multi_reduction <add>, %134, %cst_44 [1] : vector<16x32xf32> to vector<16xf32>
    %136 = vector.shape_cast %135 : vector<16xf32> to vector<16x1xf32>
    %cst_45 = arith.constant 3.200000e+01 : f32
    %137 = vector.broadcast %cst_45 : f32 to vector<16x1xf32>
    %138 = arith.divf %136, %137 : vector<16x1xf32>
    %139 = vector.broadcast %129 : vector<16x1xf32> to vector<16x32xf32>
    %140 = arith.subf %125, %139 : vector<16x32xf32>
    %cst_46 = arith.constant 9.99999974E-6 : f32
    %141 = vector.broadcast %cst_46 : f32 to vector<16x1xf32>
    %142 = arith.addf %138, %141 : vector<16x1xf32>
    %143 = math.rsqrt %142 : vector<16x1xf32>
    %144 = vector.broadcast %143 : vector<16x1xf32> to vector<16x32xf32>
    %145 = arith.mulf %140, %144 : vector<16x32xf32>
    %146 = vector.broadcast %7 : vector<1x32xf32> to vector<16x32xf32>
    %147 = arith.mulf %145, %146 : vector<16x32xf32>
    %148 = vector.broadcast %8 : vector<1x32xf32> to vector<16x32xf32>
    %149 = arith.addf %147, %148 : vector<16x32xf32>
    %c0_47 = arith.constant 0 : index
    %c0_48 = arith.constant 0 : index
    %150 = vector.load %arg3[%c0_47, %c0_48] : memref<32x64xf32, #tpu.memory_space<vmem>>, vector<32x64xf32>
    %cst_49 = arith.constant dense<0.000000e+00> : vector<16x64xf32>
    %151 = tpu.matmul %149, %150, %cst_49 {dimension_numbers = #tpu.dot_dimension_numbers<[1], [0], [0], [1], [0, 0, 1, 1], [], []>} : vector<16x32xf32>, vector<32x64xf32>, vector<16x64xf32> -> vector<16x64xf32>
    %152 = vector.broadcast %3 : vector<1x64xf32> to vector<16x64xf32>
    %153 = arith.addf %151, %152 : vector<16x64xf32>
    %cst_50 = arith.constant 0.000000e+00 : f32
    %154 = vector.broadcast %cst_50 : f32 to vector<16x64xf32>
    %155 = arith.maximumf %153, %154 : vector<16x64xf32>
    %c0_51 = arith.constant 0 : index
    %c0_52 = arith.constant 0 : index
    %156 = vector.load %arg4[%c0_51, %c0_52] : memref<64x32xf32, #tpu.memory_space<vmem>>, vector<64x32xf32>
    %cst_53 = arith.constant dense<0.000000e+00> : vector<16x32xf32>
    %157 = tpu.matmul %155, %156, %cst_53 {dimension_numbers = #tpu.dot_dimension_numbers<[1], [0], [0], [1], [0, 0, 1, 1], [], []>} : vector<16x64xf32>, vector<64x32xf32>, vector<16x32xf32> -> vector<16x32xf32>
    %158 = vector.broadcast %4 : vector<1x32xf32> to vector<16x32xf32>
    %159 = arith.addf %157, %158 : vector<16x32xf32>
    %160 = arith.addf %125, %159 : vector<16x32xf32>
    %c0_54 = arith.constant 0 : index
    %c0_55 = arith.constant 0 : index
    %161 = vector.load %arg7[%c0_54, %c0_55] : memref<16x32xf32, #tpu.memory_space<vmem>>, vector<16x32xf32>
    tpu.vector_store %arg7[%c0_54, %c0_55], %160 {strides = array<i32>} : memref<16x32xf32, #tpu.memory_space<vmem>>, vector<16x32xf32>,
    %162 = tpu.concatenate %70, %86, %102, %118 in 1 : vector<16x16xf32>, vector<16x16xf32>, vector<16x16xf32>, vector<16x16xf32> -> vector<16x64xf32>
    %c0_56 = arith.constant 0 : index
    %c0_57 = arith.constant 0 : index
    %163 = vector.load %arg8[%c0_56, %c0_57] : memref<16x64xf32, #tpu.memory_space<vmem>>, vector<16x64xf32>
    tpu.vector_store %arg8[%c0_56, %c0_57], %162 {strides = array<i32>} : memref<16x64xf32, #tpu.memory_space<vmem>>, vector<16x64xf32>,
    return
  }
}

</mosaic_0001>

<llo_original>
// kernel: encoder_layer.1
$region0: #{encoder_layer.1}
  #allocation0 [shape = 'u32[]', space=smem, size = 0x4, offset = 0x4, fixed_abs, tag = 'smem constant byte address 0x4 - core index']
  #allocation1 [shape = 'u32[144,128]{1,0:T(1,128)}', space=vmem, size = 0x12000, scoped, tag = 'internal scratch']
  %s0 = inlined_call_operand.vmem [shape: f32[16,32], index: 0, kind: input, shape index: {}]
  %s1 = inlined_call_operand.vmem [shape: f32[32,96], index: 1, kind: input, shape index: {}]
  %s2 = inlined_call_operand.vmem [shape: f32[32,32], index: 2, kind: input, shape index: {}]
  %s3 = inlined_call_operand.vmem [shape: f32[32,64], index: 3, kind: input, shape index: {}]
  %s4 = inlined_call_operand.vmem [shape: f32[64,32], index: 4, kind: input, shape index: {}]
  %s5 = inlined_call_operand.vmem [shape: f32[1,224], index: 5, kind: input, shape index: {}]
  %s6 = inlined_call_operand.hbm [shape: f32[4,32], index: 6, kind: input, shape index: {}]
  %s7 = inlined_call_operand.hbm [shape: f32[16,32], index: 7, kind: output, shape index: {0}]
  %s8 = inlined_call_operand.vmem [shape: f32[16,64], index: 8, kind: output, shape index: {1}]
  %9 = xla_tuple %s7, %s8
  %s10 = sld [smem:[#allocation0]]
  $region50: #{encoder_layer.1} parent=0
    _
  %s12 = ssub.s32 1, %s10
  %s13 = scalar_select 0, %s12, %s10
  $region1: #{encoder_layer.1} parent=0
    #allocation2 [shape = 'u8[2048]{0}', space=vmem, size = 0x800, scoped, tag = 'input window, operand 6, single buffered']
    #allocation3 [shape = 's32[1]{0}', space=sflag, size = 0x4, scoped, tag = 'scoped memory for encoder_layer.1']
    #allocation4 [shape = 's32[1]{0}', space=sflag, size = 0x4, scoped, tag = 'scoped memory for encoder_layer.1']
    #allocation5 [shape = 'u8[8192]{0}', space=vmem, size = 0x2000, scoped, tag = 'output window, operand 0, single buffered']
    %14 = vsyncpa [#allocation3], 0
    %15 = vsyncpa [#allocation4], 0
    // Predicated region
    $region2: #{encoder_layer.1} parent=1 // pred_check
      _
    $region3: #{encoder_layer.1} parent=1 // pred_check_branch
      %17 = sbr.rel (0) target = $region5
    $region4: #{encoder_layer.1} parent=1 // pred_region
      _
    $region5: #{encoder_layer.1} parent=1 // pred_fallthru
      _
    // Predicated region
    $region6: #{encoder_layer.1} parent=1 // pred_check
      _
    $region7: #{encoder_layer.1} parent=1 // pred_check_branch
      %19 = sbr.rel (0) target = $region9
    $region8: #{encoder_layer.1} parent=1 // pred_region
      _
    $region9: #{encoder_layer.1} parent=1 // pred_fallthru
      _
    // Predicated region
    $region10: #{encoder_layer.1} parent=1 // pred_check
      _
    $region11: #{encoder_layer.1} parent=1 // pred_check_branch
      %21 = sbr.rel (0) target = $region13
    $region12: #{encoder_layer.1} parent=1 // pred_region
      _
    $region13: #{encoder_layer.1} parent=1 // pred_fallthru
      _
    // Predicated region
    $region14: #{encoder_layer.1} parent=1 // pred_check
      _
    $region15: #{encoder_layer.1} parent=1 // pred_check_branch
      %23 = sbr.rel (0) target = $region17
    $region16: #{encoder_layer.1} parent=1 // pred_region
      _
    $region17: #{encoder_layer.1} parent=1 // pred_fallthru
      _
    // Predicated region
    $region18: #{encoder_layer.1} parent=1 // pred_check
      _
    $region19: #{encoder_layer.1} parent=1 // pred_check_branch
      %25 = sbr.rel (0) target = $region21
    $region20: #{encoder_layer.1} parent=1 // pred_region
      _
    $region21: #{encoder_layer.1} parent=1 // pred_fallthru
      _
    // Predicated region
    $region22: #{encoder_layer.1} parent=1 // pred_check
      _
    $region23: #{encoder_layer.1} parent=1 // pred_check_branch
      %27 = sbr.rel (0) target = $region25
    $region24: #{encoder_layer.1} parent=1 // pred_region
      _
    $region25: #{encoder_layer.1} parent=1 // pred_fallthru
      _
    // Predicated region
    $region26: #{encoder_layer.1} parent=1 // pred_check
      _
    $region27: #{encoder_layer.1} parent=1 // pred_check_branch
      %29 = sbr.rel (0) target = $region29
    $region28: #{encoder_layer.1} parent=1 // pred_region
      %s31 = ssub.s32 64, 64
      %32 = vsyncadd [#allocation3], %s31
      %s34 = sshll.u32 [#allocation2], 4
      %s35 = int_to_ptr.vmem [resolvable:$true] %s34
      %37 = dma.hbm_to_vmem [thread:$0]  %s6, 64, %s35, [#allocation3]
    $region29: #{encoder_layer.1} parent=1 // pred_fallthru
      _
    // Predicated region
    $region30: #{encoder_layer.1} parent=1 // pred_check
      _
    $region31: #{encoder_layer.1} parent=1 // pred_check_branch
      %39 = sbr.rel (0) target = $region33
    $region32: #{encoder_layer.1} parent=1 // pred_region
      %40 = dma.done [#allocation3], 64
    $region33: #{encoder_layer.1} parent=1 // pred_fallthru
      _
    %v41 = vld [vmem:[%s0] sm:$0xff]
    %v42 = vld [vmem:[%s0 + $0x8] sm:$0xff]
    %v43 = vld [vmem:[%s5] sm:$0x1]
    %v44 = vld [vmem:[%s5 + $0x1] sm:$0x1]
    %v45 = vld [vmem:[#allocation2] sm:$0x1]
    %v46 = vld [vmem:[#allocation2 + $0x1] sm:$0x1]
    %v47 = vld [vmem:[#allocation2 + $0x2] sm:$0x1]
    %v48 = vld [vmem:[#allocation2 + $0x3] sm:$0x1]
    %vm49 = vcmask 261120
    %v50 = vsel %vm49, %v41, 0.0
    %51 = vadd.xlane.f32.xlu0 %v50
    %v52 = vpop.xlane.xlu0 %51
    %v53 = vsel %vm49, %v42, 0.0
    %54 = vadd.xlane.f32.xlu0 %v53
    %v55 = vpop.xlane.xlu0 %54
    %v56 = vrcp.pop 32.0
    %v57 = vmul.f32 %v52, %v56
    %v58 = vmul.f32 %v55, %v56
    %v59 = vsub.f32 %v41, %v57
    %v60 = vsub.f32 %v42, %v58
    %v61 = vmul.f32 %v59, %v59
    %v62 = vmul.f32 %v60, %v60
    %v63 = vsel %vm49, %v61, 0.0
    %64 = vadd.xlane.f32.xlu0 %v63
    %v65 = vpop.xlane.xlu0 %64
    %v66 = vsel %vm49, %v62, 0.0
    %67 = vadd.xlane.f32.xlu0 %v66
    %v68 = vpop.xlane.xlu0 %67
    %v69 = vmul.f32 %v65, %v56
    %v70 = vmul.f32 %v68, %v56
    %v71 = vadd.f32 %v69, 1e-05
    %v72 = vadd.f32 %v70, 1e-05
    %v73 = vrsqrt.pop %v71
    %v74 = vrsqrt.pop %v72
    %v75 = vmul.f32 %v59, %v73
    %v76 = vmul.f32 %v60, %v74
    %v77 = vlaneseq
    %v78 = vshrl.u32 %v77, 7
    %v79 = vsub.s32 0, %v78
    %v80 = vrot.slane %v45, %v79
    %v81 = vmul.f32 %v75, %v80
    %v82 = vmul.f32 %v76, %v80
    %v83 = vlaneseq
    %v84 = vshrl.u32 %v83, 7
    %v85 = vsub.s32 0, %v84
    %v86 = vrot.slane %v46, %v85
    %v87 = vadd.f32 %v81, %v86
    %v88 = vadd.f32 %v82, %v86
    %v89 = vld [vmem:[%s1] sm:$0xff]
    %v90 = vld [vmem:[%s1 + $0x8] sm:$0xff]
    %v91 = vld [vmem:[%s1 + $0x10] sm:$0xff]
    %v92 = vld [vmem:[%s1 + $0x18] sm:$0xff]
    %v94 = vlaneseq
    %v95 = vshrl.u32 %v94, 7
    %v96 = vsub.s32 0, %v95
    %v97 = vrot.slane %v43, %v96
    %v100 = vsel %vm49, %v87, 0
    %v103 = vsel %vm49, %v88, 0
    %105 = vmatprep.subr.mxu0 0.0
    %106 = vmatpush1.msra.mxu0 %v89
    %107 = vmatprep.subr.mxu0 0.0
    %108 = vmatpush1.msra.mxu0 %v90
    %109 = vmatprep.subr.mxu0 0.0
    %110 = vmatpush1.msra.mxu0 %v91
    %111 = vmatprep.subr.mxu0 0.0
    %112 = vmatpush1.msra.mxu0 %v92
    %113 = vmatprep.subr.mxu0 0.0
    %114 = vmatpush1.msra.mxu0 0.0
    %115 = vmatprep.subr.mxu0 0.0
    %116 = vmatpush1.msra.mxu0 0.0
    %117 = vmatprep.subr.mxu0 0.0
    %118 = vmatpush1.msra.mxu0 0.0
    %119 = vmatprep.subr.mxu0 0.0
    %120 = vmatpush1.msra.mxu0 0.0
    %121 = vmatprep.subr.mxu0 0.0
    %122 = vmatpush1.msra.mxu0 0.0
    %123 = vmatprep.subr.mxu0 0.0
    %124 = vmatpush1.msra.mxu0 0.0
    %125 = vmatprep.subr.mxu0 0.0
    %126 = vmatpush1.msra.mxu0 0.0
    %127 = vmatprep.subr.mxu0 0.0
    %128 = vmatpush1.msra.mxu0 0.0
    %129 = vmatprep.subr.mxu0 0.0
    %130 = vmatpush1.msra.mxu0 0.0
    %131 = vmatprep.subr.mxu0 0.0
    %132 = vmatpush1.msra.mxu0 0.0
    %133 = vmatprep.subr.mxu0 0.0
    %134 = vmatpush1.msra.mxu0 0.0
    %135 = vmatprep.subr.mxu0 0.0
    %136 = vmatpush1.msra.mxu0 0.0
    %137 = vmatprep.subr.mxu0 0.0
    %138 = vmatpush1.msra.mxu0 0.0
    %139 = vmatprep.subr.mxu0 0.0
    %140 = vmatpush1.msra.mxu0 0.0
    %141 = vmatprep.subr.mxu0 0.0
    %142 = vmatpush1.msra.mxu0 0.0
    %143 = vmatprep.subr.mxu0 0.0
    %144 = vmatpush1.msra.mxu0 0.0
    %145 = vmatprep.subr.mxu0 0.0
    %146 = vmatpush1.msra.mxu0 0.0
    %147 = vmatprep.subr.mxu0 0.0
    %148 = vmatpush1.msra.mxu0 0.0
    %149 = vmatprep.subr.mxu0 0.0
    %150 = vmatpush1.msra.mxu0 0.0
    %151 = vmatprep.subr.mxu0 0.0
    %152 = vmatpush1.msra.mxu0 0.0
    %153 = vmatprep.subr.mxu0 0.0
    %154 = vmatpush1.msra.mxu0 0.0
    %155 = vmatprep.subr.mxu0 0.0
    %156 = vmatpush1.msra.mxu0 0.0
    %157 = vmatprep.subr.mxu0 0.0
    %158 = vmatpush1.msra.mxu0 0.0
    %159 = vmatprep.subr.mxu0 0.0
    %160 = vmatpush1.msra.mxu0 0.0
    %161 = vmatprep.subr.mxu0 0.0
    %162 = vmatpush1.msra.mxu0 0.0
    %163 = vmatprep.subr.mxu0 0.0
    %164 = vmatpush1.msra.mxu0 0.0
    %165 = vmatprep.subr.mxu0 0.0
    %166 = vmatpush1.msra.mxu0 0.0
    %167 = vmatprep.subr.mxu0 0.0
    %168 = vmatpush1.msra.mxu0 0.0
    %169 = vmatprep.mubr.f32.mxu0 0.0
    %170 = vmatmul.mubr.f32.gmra.mrb[0].mxu0 %v100
    %v171 = vpop.f32.mrb[0].mxu0
    %v172 = vadd.f32 %v97, %v171
    %v173 = vpop.f32.mrb[0].mxu0
    %174 = vmatprep.mubr.f32.mxu0 0.0
    %175 = vmatmul.mubr.f32.gmra.mrb[0].mxu0 %v103
    %v176 = vpop.f32.mrb[0].mxu0
    %v177 = vadd.f32 %v97, %v176
    %v178 = vpop.f32.mrb[0].mxu0
    %179 = vdwg.mxu0
    %v180 = vmul.f32 %v172, 0.35355338
    %v181 = vmul.f32 %v177, 0.35355338
    %v182 = vlaneseq
    %v183 = vshrl.u32 %v182, 7
    %v184 = vadd.s32 %v183, 8
    %v185 = vlaneseq
    %v186 = vand.u32 %v185, 127
    %v187 = vcvt.s32.f32 %v183
    %v188 = vcvt.s32.f32 %v184
    %v189 = vmul.f32 %v187, 0.125
    %v190 = vmul.f32 %v188, 0.125
    %v191 = vfloor.f32 %v189
    %v192 = vfloor.f32 %v190
    %v193 = vcvt.s32.f32 %v186
    %v194 = vmul.f32 %v193, 0.125
    %v195 = vfloor.f32 %v194
    %vm196 = vcmp.eq.f32.partialorder %v191, %v195
    %vm197 = vcmp.eq.f32.partialorder %v192, %v195
    %v198 = vsel %vm196, 0.0, -1e+30
    %v199 = vsel %vm197, 0.0, -1e+30
    %202 = vrot.lane.b32.xlu0 %v172, 96
    %v203 = vpop.permute.xlu0 %202
    %204 = vrot.lane.b32.xlu0 %v177, 96
    %v205 = vpop.permute.xlu0 %204
    %vm206 = vcmask 64512
    %v208 = vsel %vm206, %v180, 0
    %v211 = vsel %vm206, %v181, 0
    %v213 = vsel %vm206, %v203, 0
    %v215 = vsel %vm206, %v205, 0
    %217 = vmatprep.subr.mxu0 0.0
    %218 = vmatpush1.xpose.msra.mxu0 %v213
    %219 = vmatprep.subr.mxu0 0.0
    %220 = vmatpush1.xpose.msra.mxu0 %v215
    %221 = vmatprep.subr.mxu0 0.0
    %222 = vmatpush1.xpose.msra.mxu0 0.0
    %223 = vmatprep.subr.mxu0 0.0
    %224 = vmatpush1.xpose.msra.mxu0 0.0
    %225 = vmatprep.subr.mxu0 0.0
    %226 = vmatpush1.xpose.msra.mxu0 0.0
    %227 = vmatprep.subr.mxu0 0.0
    %228 = vmatpush1.xpose.msra.mxu0 0.0
    %229 = vmatprep.subr.mxu0 0.0
    %230 = vmatpush1.xpose.msra.mxu0 0.0
    %231 = vmatprep.subr.mxu0 0.0
    %232 = vmatpush1.xpose.msra.mxu0 0.0
    %233 = vmatprep.subr.mxu0 0.0
    %234 = vmatpush1.xpose.msra.mxu0 0.0
    %235 = vmatprep.subr.mxu0 0.0
    %236 = vmatpush1.xpose.msra.mxu0 0.0
    %237 = vmatprep.subr.mxu0 0.0
    %238 = vmatpush1.xpose.msra.mxu0 0.0
    %239 = vmatprep.subr.mxu0 0.0
    %240 = vmatpush1.xpose.msra.mxu0 0.0
    %241 = vmatprep.subr.mxu0 0.0
    %242 = vmatpush1.xpose.msra.mxu0 0.0
    %243 = vmatprep.subr.mxu0 0.0
    %244 = vmatpush1.xpose.msra.mxu0 0.0
    %245 = vmatprep.subr.mxu0 0.0
    %246 = vmatpush1.xpose.msra.mxu0 0.0
    %247 = vmatprep.subr.mxu0 0.0
    %248 = vmatpush1.xpose.msra.mxu0 0.0
    %249 = vmatprep.subr.mxu0 0.0
    %250 = vmatpush1.xpose.msra.mxu0 0.0
    %251 = vmatprep.subr.mxu0 0.0
    %252 = vmatpush1.xpose.msra.mxu0 0.0
    %253 = vmatprep.subr.mxu0 0.0
    %254 = vmatpush1.xpose.msra.mxu0 0.0
    %255 = vmatprep.subr.mxu0 0.0
    %256 = vmatpush1.xpose.msra.mxu0 0.0
    %257 = vmatprep.subr.mxu0 0.0
    %258 = vmatpush1.xpose.msra.mxu0 0.0
    %259 = vmatprep.subr.mxu0 0.0
    %260 = vmatpush1.xpose.msra.mxu0 0.0
    %261 = vmatprep.subr.mxu0 0.0
    %262 = vmatpush1.xpose.msra.mxu0 0.0
    %263 = vmatprep.subr.mxu0 0.0
    %264 = vmatpush1.xpose.msra.mxu0 0.0
    %265 = vmatprep.subr.mxu0 0.0
    %266 = vmatpush1.xpose.msra.mxu0 0.0
    %267 = vmatprep.subr.mxu0 0.0
    %268 = vmatpush1.xpose.msra.mxu0 0.0
    %269 = vmatprep.subr.mxu0 0.0
    %270 = vmatpush1.xpose.msra.mxu0 0.0
    %271 = vmatprep.subr.mxu0 0.0
    %272 = vmatpush1.xpose.msra.mxu0 0.0
    %273 = vmatprep.subr.mxu0 0.0
    %274 = vmatpush1.xpose.msra.mxu0 0.0
    %275 = vmatprep.subr.mxu0 0.0
    %276 = vmatpush1.xpose.msra.mxu0 0.0
    %277 = vmatprep.subr.mxu0 0.0
    %278 = vmatpush1.xpose.msra.mxu0 0.0
    %279 = vmatprep.subr.mxu0 0.0
    %280 = vmatpush1.xpose.msra.mxu0 0.0
    %281 = vmatprep.mubr.f32.mxu0 0.0
    %282 = vmatmul.mubr.f32.gmra.mrb[0].mxu0 %v208
    %v283 = vpop.f32.mrb[0].mxu0
    %v284 = vadd.f32 %v198, %v283
    %v285 = vpop.f32.mrb[0].mxu0
    %286 = vmatprep.mubr.f32.mxu0 0.0
    %287 = vmatmul.mubr.f32.gmra.mrb[0].mxu0 %v211
    %v288 = vpop.f32.mrb[0].mxu0
    %v289 = vadd.f32 %v199, %v288
    %v290 = vpop.f32.mrb[0].mxu0
    %291 = vdwg.mxu0
    %vm292 = vcmask 130048
    %v293 = vsel %vm292, %v284, -inf
    %294 = vmax.xlane.f32.xlu0 %v293
    %v295 = vpop.xlane.xlu0 %294
    %v296 = vsel %vm292, %v289, -inf
    %297 = vmax.xlane.f32.xlu0 %v296
    %v298 = vpop.xlane.xlu0 %297
    %v299 = vsub.f32 %v284, %v295
    %v300 = vsub.f32 %v289, %v298
    %v301 = vmul.f32 %v299, 1.442695
    %v302 = vpow.pop %v301
    %v303 = vmul.f32 %v300, 1.442695
    %v304 = vpow.pop %v303
    %v305 = vsel %vm292, %v302, 0.0
    %306 = vadd.xlane.f32.xlu0 %v305
    %v307 = vpop.xlane.xlu0 %306
    %v308 = vsel %vm292, %v304, 0.0
    %309 = vadd.xlane.f32.xlu0 %v308
    %v310 = vpop.xlane.xlu0 %309
    %v311 = vrcp.pop %v307
    %v312 = vrcp.pop %v310
    %v313 = vmul.f32 %v302, %v311
    %v314 = vmul.f32 %v304, %v312
    %315 = vrot.lane.b32.xlu0 %v172, 64
    %v316 = vpop.permute.xlu0 %315
    %317 = vrot.lane.b32.xlu0 %v177, 64
    %v318 = vpop.permute.xlu0 %317
    %v322 = vsel %vm292, %v313, 0
    %v325 = vsel %vm292, %v314, 0
    %327 = vmatprep.subr.mxu0 0.0
    %328 = vmatpush1.msra.mxu0 %v316
    %329 = vmatprep.subr.mxu0 0.0
    %330 = vmatpush1.msra.mxu0 %v318
    %331 = vmatprep.subr.mxu0 0.0
    %332 = vmatpush1.msra.mxu0 0.0
    %333 = vmatprep.subr.mxu0 0.0
    %334 = vmatpush1.msra.mxu0 0.0
    %335 = vmatprep.subr.mxu0 0.0
    %336 = vmatpush1.msra.mxu0 0.0
    %337 = vmatprep.subr.mxu0 0.0
    %338 = vmatpush1.msra.mxu0 0.0
    %339 = vmatprep.subr.mxu0 0.0
    %340 = vmatpush1.msra.mxu0 0.0
    %341 = vmatprep.subr.mxu0 0.0
    %342 = vmatpush1.msra.mxu0 0.0
    %343 = vmatprep.subr.mxu0 0.0
    %344 = vmatpush1.msra.mxu0 0.0
    %345 = vmatprep.subr.mxu0 0.0
    %346 = vmatpush1.msra.mxu0 0.0
    %347 = vmatprep.subr.mxu0 0.0
    %348 = vmatpush1.msra.mxu0 0.0
    %349 = vmatprep.subr.mxu0 0.0
    %350 = vmatpush1.msra.mxu0 0.0
    %351 = vmatprep.subr.mxu0 0.0
    %352 = vmatpush1.msra.mxu0 0.0
    %353 = vmatprep.subr.mxu0 0.0
    %354 = vmatpush1.msra.mxu0 0.0
    %355 = vmatprep.subr.mxu0 0.0
    %356 = vmatpush1.msra.mxu0 0.0
    %357 = vmatprep.subr.mxu0 0.0
    %358 = vmatpush1.msra.mxu0 0.0
    %359 = vmatprep.subr.mxu0 0.0
    %360 = vmatpush1.msra.mxu0 0.0
    %361 = vmatprep.subr.mxu0 0.0
    %362 = vmatpush1.msra.mxu0 0.0
    %363 = vmatprep.subr.mxu0 0.0
    %364 = vmatpush1.msra.mxu0 0.0
    %365 = vmatprep.subr.mxu0 0.0
    %366 = vmatpush1.msra.mxu0 0.0
    %367 = vmatprep.subr.mxu0 0.0
    %368 = vmatpush1.msra.mxu0 0.0
    %369 = vmatprep.subr.mxu0 0.0
    %370 = vmatpush1.msra.mxu0 0.0
    %371 = vmatprep.subr.mxu0 0.0
    %372 = vmatpush1.msra.mxu0 0.0
    %373 = vmatprep.subr.mxu0 0.0
    %374 = vmatpush1.msra.mxu0 0.0
    %375 = vmatprep.subr.mxu0 0.0
    %376 = vmatpush1.msra.mxu0 0.0
    %377 = vmatprep.subr.mxu0 0.0
    %378 = vmatpush1.msra.mxu0 0.0
    %379 = vmatprep.subr.mxu0 0.0
    %380 = vmatpush1.msra.mxu0 0.0
    %381 = vmatprep.subr.mxu0 0.0
    %382 = vmatpush1.msra.mxu0 0.0
    %383 = vmatprep.subr.mxu0 0.0
    %384 = vmatpush1.msra.mxu0 0.0
    %385 = vmatprep.subr.mxu0 0.0
    %386 = vmatpush1.msra.mxu0 0.0
    %387 = vmatprep.subr.mxu0 0.0
    %388 = vmatpush1.msra.mxu0 0.0
    %389 = vmatprep.subr.mxu0 0.0
    %390 = vmatpush1.msra.mxu0 0.0
    %391 = vmatprep.mubr.f32.mxu0 0.0
    %392 = vmatmul.mubr.f32.gmra.mrb[0].mxu0 %v322
    %v393 = vpop.f32.mrb[0].mxu0
    %v394 = vadd.f32 0.0, %v393
    %v395 = vpop.f32.mrb[0].mxu0
    %396 = vmatprep.mubr.f32.mxu0 0.0
    %397 = vmatmul.mubr.f32.gmra.mrb[0].mxu0 %v325
    %v398 = vpop.f32.mrb[0].mxu0
    %v399 = vadd.f32 0.0, %v398
    %v400 = vpop.f32.mrb[0].mxu0
    %401 = vdwg.mxu0
    %402 = vrot.lane.b32.xlu0 %v180, 120
    %v403 = vpop.permute.xlu0 %402
    %404 = vrot.lane.b32.xlu0 %v181, 120
    %v405 = vpop.permute.xlu0 %404
    %406 = vrot.lane.b32.xlu0 %v172, 88
    %v407 = vpop.permute.xlu0 %406
    %408 = vrot.lane.b32.xlu0 %v177, 88
    %v409 = vpop.permute.xlu0 %408
    %v410 = vsel %vm206, %v403, 0
    %v412 = vsel %vm206, %v405, 0
    %v414 = vsel %vm206, %v407, 0
    %v416 = vsel %vm206, %v409, 0
    %418 = vmatprep.subr.mxu0 0.0
    %419 = vmatpush1.xpose.msra.mxu0 %v414
    %420 = vmatprep.subr.mxu0 0.0
    %421 = vmatpush1.xpose.msra.mxu0 %v416
    %422 = vmatprep.subr.mxu0 0.0
    %423 = vmatpush1.xpose.msra.mxu0 0.0
    %424 = vmatprep.subr.mxu0 0.0
    %425 = vmatpush1.xpose.msra.mxu0 0.0
    %426 = vmatprep.subr.mxu0 0.0
    %427 = vmatpush1.xpose.msra.mxu0 0.0
    %428 = vmatprep.subr.mxu0 0.0
    %429 = vmatpush1.xpose.msra.mxu0 0.0
    %430 = vmatprep.subr.mxu0 0.0
    %431 = vmatpush1.xpose.msra.mxu0 0.0
    %432 = vmatprep.subr.mxu0 0.0
    %433 = vmatpush1.xpose.msra.mxu0 0.0
    %434 = vmatprep.subr.mxu0 0.0
    %435 = vmatpush1.xpose.msra.mxu0 0.0
    %436 = vmatprep.subr.mxu0 0.0
    %437 = vmatpush1.xpose.msra.mxu0 0.0
    %438 = vmatprep.subr.mxu0 0.0
    %439 = vmatpush1.xpose.msra.mxu0 0.0
    %440 = vmatprep.subr.mxu0 0.0
    %441 = vmatpush1.xpose.msra.mxu0 0.0
    %442 = vmatprep.subr.mxu0 0.0
    %443 = vmatpush1.xpose.msra.mxu0 0.0
    %444 = vmatprep.subr.mxu0 0.0
    %445 = vmatpush1.xpose.msra.mxu0 0.0
    %446 = vmatprep.subr.mxu0 0.0
    %447 = vmatpush1.xpose.msra.mxu0 0.0
    %448 = vmatprep.subr.mxu0 0.0
    %449 = vmatpush1.xpose.msra.mxu0 0.0
    %450 = vmatprep.subr.mxu0 0.0
    %451 = vmatpush1.xpose.msra.mxu0 0.0
    %452 = vmatprep.subr.mxu0 0.0
    %453 = vmatpush1.xpose.msra.mxu0 0.0
    %454 = vmatprep.subr.mxu0 0.0
    %455 = vmatpush1.xpose.msra.mxu0 0.0
    %456 = vmatprep.subr.mxu0 0.0
    %457 = vmatpush1.xpose.msra.mxu0 0.0
    %458 = vmatprep.subr.mxu0 0.0
    %459 = vmatpush1.xpose.msra.mxu0 0.0
    %460 = vmatprep.subr.mxu0 0.0
    %461 = vmatpush1.xpose.msra.mxu0 0.0
    %462 = vmatprep.subr.mxu0 0.0
    %463 = vmatpush1.xpose.msra.mxu0 0.0
    %464 = vmatprep.subr.mxu0 0.0
    %465 = vmatpush1.xpose.msra.mxu0 0.0
    %466 = vmatprep.subr.mxu0 0.0
    %467 = vmatpush1.xpose.msra.mxu0 0.0
    %468 = vmatprep.subr.mxu0 0.0
    %469 = vmatpush1.xpose.msra.mxu0 0.0
    %470 = vmatprep.subr.mxu0 0.0
    %471 = vmatpush1.xpose.msra.mxu0 0.0
    %472 = vmatprep.subr.mxu0 0.0
    %473 = vmatpush1.xpose.msra.mxu0 0.0
    %474 = vmatprep.subr.mxu0 0.0
    %475 = vmatpush1.xpose.msra.mxu0 0.0
    %476 = vmatprep.subr.mxu0 0.0
    %477 = vmatpush1.xpose.msra.mxu0 0.0
    %478 = vmatprep.subr.mxu0 0.0
    %479 = vmatpush1.xpose.msra.mxu0 0.0
    %480 = vmatprep.subr.mxu0 0.0
    %481 = vmatpush1.xpose.msra.mxu0 0.0
    %482 = vmatprep.mubr.f32.mxu0 0.0
    %483 = vmatmul.mubr.f32.gmra.mrb[0].mxu0 %v410
    %v484 = vpop.f32.mrb[0].mxu0
    %v485 = vadd.f32 %v198, %v484
    %v486 = vpop.f32.mrb[0].mxu0
    %487 = vmatprep.mubr.f32.mxu0 0.0
    %488 = vmatmul.mubr.f32.gmra.mrb[0].mxu0 %v412
    %v489 = vpop.f32.mrb[0].mxu0
    %v490 = vadd.f32 %v199, %v489
    %v491 = vpop.f32.mrb[0].mxu0
    %492 = vdwg.mxu0
    %v493 = vsel %vm292, %v485, -inf
    %494 = vmax.xlane.f32.xlu0 %v493
    %v495 = vpop.xlane.xlu0 %494
    %v496 = vsel %vm292, %v490, -inf
    %497 = vmax.xlane.f32.xlu0 %v496
    %v498 = vpop.xlane.xlu0 %497
    %v499 = vsub.f32 %v485, %v495
    %v500 = vsub.f32 %v490, %v498
    %v501 = vmul.f32 %v499, 1.442695
    %v502 = vpow.pop %v501
    %v503 = vmul.f32 %v500, 1.442695
    %v504 = vpow.pop %v503
    %v505 = vsel %vm292, %v502, 0.0
    %506 = vadd.xlane.f32.xlu0 %v505
    %v507 = vpop.xlane.xlu0 %506
    %v508 = vsel %vm292, %v504, 0.0
    %509 = vadd.xlane.f32.xlu0 %v508
    %v510 = vpop.xlane.xlu0 %509
    %v511 = vrcp.pop %v507
    %v512 = vrcp.pop %v510
    %v513 = vmul.f32 %v502, %v511
    %v514 = vmul.f32 %v504, %v512
    %515 = vrot.lane.b32.xlu0 %v172, 56
    %v516 = vpop.permute.xlu0 %515
    %517 = vrot.lane.b32.xlu0 %v177, 56
    %v518 = vpop.permute.xlu0 %517
    %v522 = vsel %vm292, %v513, 0
    %v525 = vsel %vm292, %v514, 0
    %527 = vmatprep.subr.mxu0 0.0
    %528 = vmatpush1.msra.mxu0 %v516
    %529 = vmatprep.subr.mxu0 0.0
    %530 = vmatpush1.msra.mxu0 %v518
    %531 = vmatprep.subr.mxu0 0.0
    %532 = vmatpush1.msra.mxu0 0.0
    %533 = vmatprep.subr.mxu0 0.0
    %534 = vmatpush1.msra.mxu0 0.0
    %535 = vmatprep.subr.mxu0 0.0
    %536 = vmatpush1.msra.mxu0 0.0
    %537 = vmatprep.subr.mxu0 0.0
    %538 = vmatpush1.msra.mxu0 0.0
    %539 = vmatprep.subr.mxu0 0.0
    %540 = vmatpush1.msra.mxu0 0.0
    %541 = vmatprep.subr.mxu0 0.0
    %542 = vmatpush1.msra.mxu0 0.0
    %543 = vmatprep.subr.mxu0 0.0
    %544 = vmatpush1.msra.mxu0 0.0
    %545 = vmatprep.subr.mxu0 0.0
    %546 = vmatpush1.msra.mxu0 0.0
    %547 = vmatprep.subr.mxu0 0.0
    %548 = vmatpush1.msra.mxu0 0.0
    %549 = vmatprep.subr.mxu0 0.0
    %550 = vmatpush1.msra.mxu0 0.0
    %551 = vmatprep.subr.mxu0 0.0
    %552 = vmatpush1.msra.mxu0 0.0
    %553 = vmatprep.subr.mxu0 0.0
    %554 = vmatpush1.msra.mxu0 0.0
    %555 = vmatprep.subr.mxu0 0.0
    %556 = vmatpush1.msra.mxu0 0.0
    %557 = vmatprep.subr.mxu0 0.0
    %558 = vmatpush1.msra.mxu0 0.0
    %559 = vmatprep.subr.mxu0 0.0
    %560 = vmatpush1.msra.mxu0 0.0
    %561 = vmatprep.subr.mxu0 0.0
    %562 = vmatpush1.msra.mxu0 0.0
    %563 = vmatprep.subr.mxu0 0.0
    %564 = vmatpush1.msra.mxu0 0.0
    %565 = vmatprep.subr.mxu0 0.0
    %566 = vmatpush1.msra.mxu0 0.0
    %567 = vmatprep.subr.mxu0 0.0
    %568 = vmatpush1.msra.mxu0 0.0
    %569 = vmatprep.subr.mxu0 0.0
    %570 = vmatpush1.msra.mxu0 0.0
    %571 = vmatprep.subr.mxu0 0.0
    %572 = vmatpush1.msra.mxu0 0.0
    %573 = vmatprep.subr.mxu0 0.0
    %574 = vmatpush1.msra.mxu0 0.0
    %575 = vmatprep.subr.mxu0 0.0
    %576 = vmatpush1.msra.mxu0 0.0
    %577 = vmatprep.subr.mxu0 0.0
    %578 = vmatpush1.msra.mxu0 0.0
    %579 = vmatprep.subr.mxu0 0.0
    %580 = vmatpush1.msra.mxu0 0.0
    %581 = vmatprep.subr.mxu0 0.0
    %582 = vmatpush1.msra.mxu0 0.0
    %583 = vmatprep.subr.mxu0 0.0
    %584 = vmatpush1.msra.mxu0 0.0
    %585 = vmatprep.subr.mxu0 0.0
    %586 = vmatpush1.msra.mxu0 0.0
    %587 = vmatprep.subr.mxu0 0.0
    %588 = vmatpush1.msra.mxu0 0.0
    %589 = vmatprep.subr.mxu0 0.0
    %590 = vmatpush1.msra.mxu0 0.0
    %591 = vmatprep.mubr.f32.mxu0 0.0
    %592 = vmatmul.mubr.f32.gmra.mrb[0].mxu0 %v522
    %v593 = vpop.f32.mrb[0].mxu0
    %v594 = vadd.f32 0.0, %v593
    %v595 = vpop.f32.mrb[0].mxu0
    %596 = vmatprep.mubr.f32.mxu0 0.0
    %597 = vmatmul.mubr.f32.gmra.mrb[0].mxu0 %v525
    %v598 = vpop.f32.mrb[0].mxu0
    %v599 = vadd.f32 0.0, %v598
    %v600 = vpop.f32.mrb[0].mxu0
    %601 = vdwg.mxu0
    %602 = vrot.lane.b32.xlu0 %v180, 112
    %v603 = vpop.permute.xlu0 %602
    %604 = vrot.lane.b32.xlu0 %v181, 112
    %v605 = vpop.permute.xlu0 %604
    %606 = vrot.lane.b32.xlu0 %v172, 80
    %v607 = vpop.permute.xlu0 %606
    %608 = vrot.lane.b32.xlu0 %v177, 80
    %v609 = vpop.permute.xlu0 %608
    %v610 = vsel %vm206, %v603, 0
    %v612 = vsel %vm206, %v605, 0
    %v614 = vsel %vm206, %v607, 0
    %v616 = vsel %vm206, %v609, 0
    %618 = vmatprep.subr.mxu0 0.0
    %619 = vmatpush1.xpose.msra.mxu0 %v614
    %620 = vmatprep.subr.mxu0 0.0
    %621 = vmatpush1.xpose.msra.mxu0 %v616
    %622 = vmatprep.subr.mxu0 0.0
    %623 = vmatpush1.xpose.msra.mxu0 0.0
    %624 = vmatprep.subr.mxu0 0.0
    %625 = vmatpush1.xpose.msra.mxu0 0.0
    %626 = vmatprep.subr.mxu0 0.0
    %627 = vmatpush1.xpose.msra.mxu0 0.0
    %628 = vmatprep.subr.mxu0 0.0
    %629 = vmatpush1.xpose.msra.mxu0 0.0
    %630 = vmatprep.subr.mxu0 0.0
    %631 = vmatpush1.xpose.msra.mxu0 0.0
    %632 = vmatprep.subr.mxu0 0.0
    %633 = vmatpush1.xpose.msra.mxu0 0.0
    %634 = vmatprep.subr.mxu0 0.0
    %635 = vmatpush1.xpose.msra.mxu0 0.0
    %636 = vmatprep.subr.mxu0 0.0
    %637 = vmatpush1.xpose.msra.mxu0 0.0
    %638 = vmatprep.subr.mxu0 0.0
    %639 = vmatpush1.xpose.msra.mxu0 0.0
    %640 = vmatprep.subr.mxu0 0.0
    %641 = vmatpush1.xpose.msra.mxu0 0.0
    %642 = vmatprep.subr.mxu0 0.0
    %643 = vmatpush1.xpose.msra.mxu0 0.0
    %644 = vmatprep.subr.mxu0 0.0
    %645 = vmatpush1.xpose.msra.mxu0 0.0
    %646 = vmatprep.subr.mxu0 0.0
    %647 = vmatpush1.xpose.msra.mxu0 0.0
    %648 = vmatprep.subr.mxu0 0.0
    %649 = vmatpush1.xpose.msra.mxu0 0.0
    %650 = vmatprep.subr.mxu0 0.0
    %651 = vmatpush1.xpose.msra.mxu0 0.0
    %652 = vmatprep.subr.mxu0 0.0
    %653 = vmatpush1.xpose.msra.mxu0 0.0
    %654 = vmatprep.subr.mxu0 0.0
    %655 = vmatpush1.xpose.msra.mxu0 0.0
    %656 = vmatprep.subr.mxu0 0.0
    %657 = vmatpush1.xpose.msra.mxu0 0.0
    %658 = vmatprep.subr.mxu0 0.0
    %659 = vmatpush1.xpose.msra.mxu0 0.0
    %660 = vmatprep.subr.mxu0 0.0
    %661 = vmatpush1.xpose.msra.mxu0 0.0
    %662 = vmatprep.subr.mxu0 0.0
    %663 = vmatpush1.xpose.msra.mxu0 0.0
    %664 = vmatprep.subr.mxu0 0.0
    %665 = vmatpush1.xpose.msra.mxu0 0.0
    %666 = vmatprep.subr.mxu0 0.0
    %667 = vmatpush1.xpose.msra.mxu0 0.0
    %668 = vmatprep.subr.mxu0 0.0
    %669 = vmatpush1.xpose.msra.mxu0 0.0
    %670 = vmatprep.subr.mxu0 0.0
    %671 = vmatpush1.xpose.msra.mxu0 0.0
    %672 = vmatprep.subr.mxu0 0.0
    %673 = vmatpush1.xpose.msra.mxu0 0.0
    %674 = vmatprep.subr.mxu0 0.0
    %675 = vmatpush1.xpose.msra.mxu0 0.0
    %676 = vmatprep.subr.mxu0 0.0
    %677 = vmatpush1.xpose.msra.mxu0 0.0
    %678 = vmatprep.subr.mxu0 0.0
    %679 = vmatpush1.xpose.msra.mxu0 0.0
    %680 = vmatprep.subr.mxu0 0.0
    %681 = vmatpush1.xpose.msra.mxu0 0.0
    %682 = vmatprep.mubr.f32.mxu0 0.0
    %683 = vmatmul.mubr.f32.gmra.mrb[0].mxu0 %v610
    %v684 = vpop.f32.mrb[0].mxu0
    %v685 = vadd.f32 %v198, %v684
    %v686 = vpop.f32.mrb[0].mxu0
    %687 = vmatprep.mubr.f32.mxu0 0.0
    %688 = vmatmul.mubr.f32.gmra.mrb[0].mxu0 %v612
    %v689 = vpop.f32.mrb[0].mxu0
    %v690 = vadd.f32 %v199, %v689
    %v691 = vpop.f32.mrb[0].mxu0
    %692 = vdwg.mxu0
    %v693 = vsel %vm292, %v685, -inf
    %694 = vmax.xlane.f32.xlu0 %v693
    %v695 = vpop.xlane.xlu0 %694
    %v696 = vsel %vm292, %v690, -inf
    %697 = vmax.xlane.f32.xlu0 %v696
    %v698 = vpop.xlane.xlu0 %697
    %v699 = vsub.f32 %v685, %v695
    %v700 = vsub.f32 %v690, %v698
    %v701 = vmul.f32 %v699, 1.442695
    %v702 = vpow.pop %v701
    %v703 = vmul.f32 %v700, 1.442695
    %v704 = vpow.pop %v703
    %v705 = vsel %vm292, %v702, 0.0
    %706 = vadd.xlane.f32.xlu0 %v705
    %v707 = vpop.xlane.xlu0 %706
    %v708 = vsel %vm292, %v704, 0.0
    %709 = vadd.xlane.f32.xlu0 %v708
    %v710 = vpop.xlane.xlu0 %709
    %v711 = vrcp.pop %v707
    %v712 = vrcp.pop %v710
    %v713 = vmul.f32 %v702, %v711
    %v714 = vmul.f32 %v704, %v712
    %715 = vrot.lane.b32.xlu0 %v172, 48
    %v716 = vpop.permute.xlu0 %715
    %717 = vrot.lane.b32.xlu0 %v177, 48
    %v718 = vpop.permute.xlu0 %717
    %v722 = vsel %vm292, %v713, 0
    %v725 = vsel %vm292, %v714, 0
    %727 = vmatprep.subr.mxu0 0.0
    %728 = vmatpush1.msra.mxu0 %v716
    %729 = vmatprep.subr.mxu0 0.0
    %730 = vmatpush1.msra.mxu0 %v718
    %731 = vmatprep.subr.mxu0 0.0
    %732 = vmatpush1.msra.mxu0 0.0
    %733 = vmatprep.subr.mxu0 0.0
    %734 = vmatpush1.msra.mxu0 0.0
    %735 = vmatprep.subr.mxu0 0.0
    %736 = vmatpush1.msra.mxu0 0.0
    %737 = vmatprep.subr.mxu0 0.0
    %738 = vmatpush1.msra.mxu0 0.0
    %739 = vmatprep.subr.mxu0 0.0
    %740 = vmatpush1.msra.mxu0 0.0
    %741 = vmatprep.subr.mxu0 0.0
    %742 = vmatpush1.msra.mxu0 0.0
    %743 = vmatprep.subr.mxu0 0.0
    %744 = vmatpush1.msra.mxu0 0.0
    %745 = vmatprep.subr.mxu0 0.0
    %746 = vmatpush1.msra.mxu0 0.0
    %747 = vmatprep.subr.mxu0 0.0
    %748 = vmatpush1.msra.mxu0 0.0
    %749 = vmatprep.subr.mxu0 0.0
    %750 = vmatpush1.msra.mxu0 0.0
    %751 = vmatprep.subr.mxu0 0.0
    %752 = vmatpush1.msra.mxu0 0.0
    %753 = vmatprep.subr.mxu0 0.0
    %754 = vmatpush1.msra.mxu0 0.0
    %755 = vmatprep.subr.mxu0 0.0
    %756 = vmatpush1.msra.mxu0 0.0
    %757 = vmatprep.subr.mxu0 0.0
    %758 = vmatpush1.msra.mxu0 0.0
    %759 = vmatprep.subr.mxu0 0.0
    %760 = vmatpush1.msra.mxu0 0.0
    %761 = vmatprep.subr.mxu0 0.0
    %762 = vmatpush1.msra.mxu0 0.0
    %763 = vmatprep.subr.mxu0 0.0
    %764 = vmatpush1.msra.mxu0 0.0
    %765 = vmatprep.subr.mxu0 0.0
    %766 = vmatpush1.msra.mxu0 0.0
    %767 = vmatprep.subr.mxu0 0.0
    %768 = vmatpush1.msra.mxu0 0.0
    %769 = vmatprep.subr.mxu0 0.0
    %770 = vmatpush1.msra.mxu0 0.0
    %771 = vmatprep.subr.mxu0 0.0
    %772 = vmatpush1.msra.mxu0 0.0
    %773 = vmatprep.subr.mxu0 0.0
    %774 = vmatpush1.msra.mxu0 0.0
    %775 = vmatprep.subr.mxu0 0.0
    %776 = vmatpush1.msra.mxu0 0.0
    %777 = vmatprep.subr.mxu0 0.0
    %778 = vmatpush1.msra.mxu0 0.0
    %779 = vmatprep.subr.mxu0 0.0
    %780 = vmatpush1.msra.mxu0 0.0
    %781 = vmatprep.subr.mxu0 0.0
    %782 = vmatpush1.msra.mxu0 0.0
    %783 = vmatprep.subr.mxu0 0.0
    %784 = vmatpush1.msra.mxu0 0.0
    %785 = vmatprep.subr.mxu0 0.0
    %786 = vmatpush1.msra.mxu0 0.0
    %787 = vmatprep.subr.mxu0 0.0
    %788 = vmatpush1.msra.mxu0 0.0
    %789 = vmatprep.subr.mxu0 0.0
    %790 = vmatpush1.msra.mxu0 0.0
    %791 = vmatprep.mubr.f32.mxu0 0.0
    %792 = vmatmul.mubr.f32.gmra.mrb[0].mxu0 %v722
    %v793 = vpop.f32.mrb[0].mxu0
    %v794 = vadd.f32 0.0, %v793
    %v795 = vpop.f32.mrb[0].mxu0
    %796 = vmatprep.mubr.f32.mxu0 0.0
    %797 = vmatmul.mubr.f32.gmra.mrb[0].mxu0 %v725
    %v798 = vpop.f32.mrb[0].mxu0
    %v799 = vadd.f32 0.0, %v798
    %v800 = vpop.f32.mrb[0].mxu0
    %801 = vdwg.mxu0
    %802 = vrot.lane.b32.xlu0 %v180, 104
    %v803 = vpop.permute.xlu0 %802
    %804 = vrot.lane.b32.xlu0 %v181, 104
    %v805 = vpop.permute.xlu0 %804
    %806 = vrot.lane.b32.xlu0 %v172, 72
    %v807 = vpop.permute.xlu0 %806
    %808 = vrot.lane.b32.xlu0 %v177, 72
    %v809 = vpop.permute.xlu0 %808
    %v810 = vsel %vm206, %v803, 0
    %v812 = vsel %vm206, %v805, 0
    %v814 = vsel %vm206, %v807, 0
    %v816 = vsel %vm206, %v809, 0
    %818 = vmatprep.subr.mxu0 0.0
    %819 = vmatpush1.xpose.msra.mxu0 %v814
    %820 = vmatprep.subr.mxu0 0.0
    %821 = vmatpush1.xpose.msra.mxu0 %v816
    %822 = vmatprep.subr.mxu0 0.0
    %823 = vmatpush1.xpose.msra.mxu0 0.0
    %824 = vmatprep.subr.mxu0 0.0
    %825 = vmatpush1.xpose.msra.mxu0 0.0
    %826 = vmatprep.subr.mxu0 0.0
    %827 = vmatpush1.xpose.msra.mxu0 0.0
    %828 = vmatprep.subr.mxu0 0.0
    %829 = vmatpush1.xpose.msra.mxu0 0.0
    %830 = vmatprep.subr.mxu0 0.0
    %831 = vmatpush1.xpose.msra.mxu0 0.0
    %832 = vmatprep.subr.mxu0 0.0
    %833 = vmatpush1.xpose.msra.mxu0 0.0
    %834 = vmatprep.subr.mxu0 0.0
    %835 = vmatpush1.xpose.msra.mxu0 0.0
    %836 = vmatprep.subr.mxu0 0.0
    %837 = vmatpush1.xpose.msra.mxu0 0.0
    %838 = vmatprep.subr.mxu0 0.0
    %839 = vmatpush1.xpose.msra.mxu0 0.0
    %840 = vmatprep.subr.mxu0 0.0
    %841 = vmatpush1.xpose.msra.mxu0 0.0
    %842 = vmatprep.subr.mxu0 0.0
    %843 = vmatpush1.xpose.msra.mxu0 0.0
    %844 = vmatprep.subr.mxu0 0.0
    %845 = vmatpush1.xpose.msra.mxu0 0.0
    %846 = vmatprep.subr.mxu0 0.0
    %847 = vmatpush1.xpose.msra.mxu0 0.0
    %848 = vmatprep.subr.mxu0 0.0
    %849 = vmatpush1.xpose.msra.mxu0 0.0
    %850 = vmatprep.subr.mxu0 0.0
    %851 = vmatpush1.xpose.msra.mxu0 0.0
    %852 = vmatprep.subr.mxu0 0.0
    %853 = vmatpush1.xpose.msra.mxu0 0.0
    %854 = vmatprep.subr.mxu0 0.0
    %855 = vmatpush1.xpose.msra.mxu0 0.0
    %856 = vmatprep.subr.mxu0 0.0
    %857 = vmatpush1.xpose.msra.mxu0 0.0
    %858 = vmatprep.subr.mxu0 0.0
    %859 = vmatpush1.xpose.msra.mxu0 0.0
    %860 = vmatprep.subr.mxu0 0.0
    %861 = vmatpush1.xpose.msra.mxu0 0.0
    %862 = vmatprep.subr.mxu0 0.0
    %863 = vmatpush1.xpose.msra.mxu0 0.0
    %864 = vmatprep.subr.mxu0 0.0
    %865 = vmatpush1.xpose.msra.mxu0 0.0
    %866 = vmatprep.subr.mxu0 0.0
    %867 = vmatpush1.xpose.msra.mxu0 0.0
    %868 = vmatprep.subr.mxu0 0.0
    %869 = vmatpush1.xpose.msra.mxu0 0.0
    %870 = vmatprep.subr.mxu0 0.0
    %871 = vmatpush1.xpose.msra.mxu0 0.0
    %872 = vmatprep.subr.mxu0 0.0
    %873 = vmatpush1.xpose.msra.mxu0 0.0
    %874 = vmatprep.subr.mxu0 0.0
    %875 = vmatpush1.xpose.msra.mxu0 0.0
    %876 = vmatprep.subr.mxu0 0.0
    %877 = vmatpush1.xpose.msra.mxu0 0.0
    %878 = vmatprep.subr.mxu0 0.0
    %879 = vmatpush1.xpose.msra.mxu0 0.0
    %880 = vmatprep.subr.mxu0 0.0
    %881 = vmatpush1.xpose.msra.mxu0 0.0
    %882 = vmatprep.mubr.f32.mxu0 0.0
    %883 = vmatmul.mubr.f32.gmra.mrb[0].mxu0 %v810
    %v884 = vpop.f32.mrb[0].mxu0
    %v885 = vadd.f32 %v198, %v884
    %v886 = vpop.f32.mrb[0].mxu0
    %887 = vmatprep.mubr.f32.mxu0 0.0
    %888 = vmatmul.mubr.f32.gmra.mrb[0].mxu0 %v812
    %v889 = vpop.f32.mrb[0].mxu0
    %v890 = vadd.f32 %v199, %v889
    %v891 = vpop.f32.mrb[0].mxu0
    %892 = vdwg.mxu0
    %v893 = vsel %vm292, %v885, -inf
    %894 = vmax.xlane.f32.xlu0 %v893
    %v895 = vpop.xlane.xlu0 %894
    %v896 = vsel %vm292, %v890, -inf
    %897 = vmax.xlane.f32.xlu0 %v896
    %v898 = vpop.xlane.xlu0 %897
    %v899 = vsub.f32 %v885, %v895
    %v900 = vsub.f32 %v890, %v898
    %v901 = vmul.f32 %v899, 1.442695
    %v902 = vpow.pop %v901
    %v903 = vmul.f32 %v900, 1.442695
    %v904 = vpow.pop %v903
    %v905 = vsel %vm292, %v902, 0.0
    %906 = vadd.xlane.f32.xlu0 %v905
    %v907 = vpop.xlane.xlu0 %906
    %v908 = vsel %vm292, %v904, 0.0
    %909 = vadd.xlane.f32.xlu0 %v908
    %v910 = vpop.xlane.xlu0 %909
    %v911 = vrcp.pop %v907
    %v912 = vrcp.pop %v910
    %v913 = vmul.f32 %v902, %v911
    %v914 = vmul.f32 %v904, %v912
    %915 = vrot.lane.b32.xlu0 %v172, 40
    %v916 = vpop.permute.xlu0 %915
    %917 = vrot.lane.b32.xlu0 %v177, 40
    %v918 = vpop.permute.xlu0 %917
    %v922 = vsel %vm292, %v913, 0
    %v925 = vsel %vm292, %v914, 0
    %927 = vmatprep.subr.mxu0 0.0
    %928 = vmatpush1.msra.mxu0 %v916
    %929 = vmatprep.subr.mxu0 0.0
    %930 = vmatpush1.msra.mxu0 %v918
    %931 = vmatprep.subr.mxu0 0.0
    %932 = vmatpush1.msra.mxu0 0.0
    %933 = vmatprep.subr.mxu0 0.0
    %934 = vmatpush1.msra.mxu0 0.0
    %935 = vmatprep.subr.mxu0 0.0
    %936 = vmatpush1.msra.mxu0 0.0
    %937 = vmatprep.subr.mxu0 0.0
    %938 = vmatpush1.msra.mxu0 0.0
    %939 = vmatprep.subr.mxu0 0.0
    %940 = vmatpush1.msra.mxu0 0.0
    %941 = vmatprep.subr.mxu0 0.0
    %942 = vmatpush1.msra.mxu0 0.0
    %943 = vmatprep.subr.mxu0 0.0
    %944 = vmatpush1.msra.mxu0 0.0
    %945 = vmatprep.subr.mxu0 0.0
    %946 = vmatpush1.msra.mxu0 0.0
    %947 = vmatprep.subr.mxu0 0.0
    %948 = vmatpush1.msra.mxu0 0.0
    %949 = vmatprep.subr.mxu0 0.0
    %950 = vmatpush1.msra.mxu0 0.0
    %951 = vmatprep.subr.mxu0 0.0
    %952 = vmatpush1.msra.mxu0 0.0
    %953 = vmatprep.subr.mxu0 0.0
    %954 = vmatpush1.msra.mxu0 0.0
    %955 = vmatprep.subr.mxu0 0.0
    %956 = vmatpush1.msra.mxu0 0.0
    %957 = vmatprep.subr.mxu0 0.0
    %958 = vmatpush1.msra.mxu0 0.0
    %959 = vmatprep.subr.mxu0 0.0
    %960 = vmatpush1.msra.mxu0 0.0
    %961 = vmatprep.subr.mxu0 0.0
    %962 = vmatpush1.msra.mxu0 0.0
    %963 = vmatprep.subr.mxu0 0.0
    %964 = vmatpush1.msra.mxu0 0.0
    %965 = vmatprep.subr.mxu0 0.0
    %966 = vmatpush1.msra.mxu0 0.0
    %967 = vmatprep.subr.mxu0 0.0
    %968 = vmatpush1.msra.mxu0 0.0
    %969 = vmatprep.subr.mxu0 0.0
    %970 = vmatpush1.msra.mxu0 0.0
    %971 = vmatprep.subr.mxu0 0.0
    %972 = vmatpush1.msra.mxu0 0.0
    %973 = vmatprep.subr.mxu0 0.0
    %974 = vmatpush1.msra.mxu0 0.0
    %975 = vmatprep.subr.mxu0 0.0
    %976 = vmatpush1.msra.mxu0 0.0
    %977 = vmatprep.subr.mxu0 0.0
    %978 = vmatpush1.msra.mxu0 0.0
    %979 = vmatprep.subr.mxu0 0.0
    %980 = vmatpush1.msra.mxu0 0.0
    %981 = vmatprep.subr.mxu0 0.0
    %982 = vmatpush1.msra.mxu0 0.0
    %983 = vmatprep.subr.mxu0 0.0
    %984 = vmatpush1.msra.mxu0 0.0
    %985 = vmatprep.subr.mxu0 0.0
    %986 = vmatpush1.msra.mxu0 0.0
    %987 = vmatprep.subr.mxu0 0.0
    %988 = vmatpush1.msra.mxu0 0.0
    %989 = vmatprep.subr.mxu0 0.0
    %990 = vmatpush1.msra.mxu0 0.0
    %991 = vmatprep.mubr.f32.mxu0 0.0
    %992 = vmatmul.mubr.f32.gmra.mrb[0].mxu0 %v922
    %v993 = vpop.f32.mrb[0].mxu0
    %v994 = vadd.f32 0.0, %v993
    %v995 = vpop.f32.mrb[0].mxu0
    %996 = vmatprep.mubr.f32.mxu0 0.0
    %997 = vmatmul.mubr.f32.gmra.mrb[0].mxu0 %v925
    %v998 = vpop.f32.mrb[0].mxu0
    %v999 = vadd.f32 0.0, %v998
    %v1000 = vpop.f32.mrb[0].mxu0
    %1001 = vdwg.mxu0
    %1004 = vrot.lane.b32.xlu0 %v594, 8
    %v1005 = vpop.permute.xlu0 %1004
    %1006 = vrot.lane.b32.xlu0 %v599, 8
    %v1007 = vpop.permute.xlu0 %1006
    %1012 = vrot.lane.b32.xlu0 %v794, 16
    %v1013 = vpop.permute.xlu0 %1012
    %1014 = vrot.lane.b32.xlu0 %v799, 16
    %v1015 = vpop.permute.xlu0 %1014
    %1020 = vrot.lane.b32.xlu0 %v994, 24
    %v1021 = vpop.permute.xlu0 %1020
    %1022 = vrot.lane.b32.xlu0 %v999, 24
    %v1023 = vpop.permute.xlu0 %1022
    %v1026 = vsel %vm206, %v394, %v1005
    %v1027 = vsel %vm206, %v399, %v1007
    %v1028 = vsel %vm292, %v1026, %v1013
    %v1029 = vsel %vm292, %v1027, %v1015
    %vm1030 = vcmask 195584
    %v1031 = vsel %vm1030, %v1028, %v1021
    %v1032 = vsel %vm1030, %v1029, %v1023
    %v1033 = vld [vmem:[%s2] sm:$0xff]
    %v1034 = vld [vmem:[%s2 + $0x8] sm:$0xff]
    %v1035 = vld [vmem:[%s2 + $0x10] sm:$0xff]
    %v1036 = vld [vmem:[%s2 + $0x18] sm:$0xff]
    %1037 = vrot.lane.b32.xlu0 %v97, 32
    %v1038 = vpop.permute.xlu0 %1037
    %v1041 = vsel %vm49, %v1031, 0
    %v1044 = vsel %vm49, %v1032, 0
    %1046 = vmatprep.subr.mxu0 0.0
    %1047 = vmatpush1.msra.mxu0 %v1033
    %1048 = vmatprep.subr.mxu0 0.0
    %1049 = vmatpush1.msra.mxu0 %v1034
    %1050 = vmatprep.subr.mxu0 0.0
    %1051 = vmatpush1.msra.mxu0 %v1035
    %1052 = vmatprep.subr.mxu0 0.0
    %1053 = vmatpush1.msra.mxu0 %v1036
    %1054 = vmatprep.subr.mxu0 0.0
    %1055 = vmatpush1.msra.mxu0 0.0
    %1056 = vmatprep.subr.mxu0 0.0
    %1057 = vmatpush1.msra.mxu0 0.0
    %1058 = vmatprep.subr.mxu0 0.0
    %1059 = vmatpush1.msra.mxu0 0.0
    %1060 = vmatprep.subr.mxu0 0.0
    %1061 = vmatpush1.msra.mxu0 0.0
    %1062 = vmatprep.subr.mxu0 0.0
    %1063 = vmatpush1.msra.mxu0 0.0
    %1064 = vmatprep.subr.mxu0 0.0
    %1065 = vmatpush1.msra.mxu0 0.0
    %1066 = vmatprep.subr.mxu0 0.0
    %1067 = vmatpush1.msra.mxu0 0.0
    %1068 = vmatprep.subr.mxu0 0.0
    %1069 = vmatpush1.msra.mxu0 0.0
    %1070 = vmatprep.subr.mxu0 0.0
    %1071 = vmatpush1.msra.mxu0 0.0
    %1072 = vmatprep.subr.mxu0 0.0
    %1073 = vmatpush1.msra.mxu0 0.0
    %1074 = vmatprep.subr.mxu0 0.0
    %1075 = vmatpush1.msra.mxu0 0.0
    %1076 = vmatprep.subr.mxu0 0.0
    %1077 = vmatpush1.msra.mxu0 0.0
    %1078 = vmatprep.subr.mxu0 0.0
    %1079 = vmatpush1.msra.mxu0 0.0
    %1080 = vmatprep.subr.mxu0 0.0
    %1081 = vmatpush1.msra.mxu0 0.0
    %1082 = vmatprep.subr.mxu0 0.0
    %1083 = vmatpush1.msra.mxu0 0.0
    %1084 = vmatprep.subr.mxu0 0.0
    %1085 = vmatpush1.msra.mxu0 0.0
    %1086 = vmatprep.subr.mxu0 0.0
    %1087 = vmatpush1.msra.mxu0 0.0
    %1088 = vmatprep.subr.mxu0 0.0
    %1089 = vmatpush1.msra.mxu0 0.0
    %1090 = vmatprep.subr.mxu0 0.0
    %1091 = vmatpush1.msra.mxu0 0.0
    %1092 = vmatprep.subr.mxu0 0.0
    %1093 = vmatpush1.msra.mxu0 0.0
    %1094 = vmatprep.subr.mxu0 0.0
    %1095 = vmatpush1.msra.mxu0 0.0
    %1096 = vmatprep.subr.mxu0 0.0
    %1097 = vmatpush1.msra.mxu0 0.0
    %1098 = vmatprep.subr.mxu0 0.0
    %1099 = vmatpush1.msra.mxu0 0.0
    %1100 = vmatprep.subr.mxu0 0.0
    %1101 = vmatpush1.msra.mxu0 0.0
    %1102 = vmatprep.subr.mxu0 0.0
    %1103 = vmatpush1.msra.mxu0 0.0
    %1104 = vmatprep.subr.mxu0 0.0
    %1105 = vmatpush1.msra.mxu0 0.0
    %1106 = vmatprep.subr.mxu0 0.0
    %1107 = vmatpush1.msra.mxu0 0.0
    %1108 = vmatprep.subr.mxu0 0.0
    %1109 = vmatpush1.msra.mxu0 0.0
    %1110 = vmatprep.mubr.f32.mxu0 0.0
    %1111 = vmatmul.mubr.f32.gmra.mrb[0].mxu0 %v1041
    %v1112 = vpop.f32.mrb[0].mxu0
    %v1113 = vadd.f32 %v1038, %v1112
    %v1114 = vpop.f32.mrb[0].mxu0
    %1115 = vmatprep.mubr.f32.mxu0 0.0
    %1116 = vmatmul.mubr.f32.gmra.mrb[0].mxu0 %v1044
    %v1117 = vpop.f32.mrb[0].mxu0
    %v1118 = vadd.f32 %v1038, %v1117
    %v1119 = vpop.f32.mrb[0].mxu0
    %1120 = vdwg.mxu0
    %v1121 = vadd.f32 %v41, %v1113
    %v1122 = vadd.f32 %v42, %v1118
    %v1123 = vsel %vm49, %v1121, 0.0
    %1124 = vadd.xlane.f32.xlu0 %v1123
    %v1125 = vpop.xlane.xlu0 %1124
    %v1126 = vsel %vm49, %v1122, 0.0
    %1127 = vadd.xlane.f32.xlu0 %v1126
    %v1128 = vpop.xlane.xlu0 %1127
    %v1129 = vmul.f32 %v1125, %v56
    %v1130 = vmul.f32 %v1128, %v56
    %v1131 = vsub.f32 %v1121, %v1129
    %v1132 = vsub.f32 %v1122, %v1130
    %v1133 = vmul.f32 %v1131, %v1131
    %v1134 = vmul.f32 %v1132, %v1132
    %v1135 = vsel %vm49, %v1133, 0.0
    %1136 = vadd.xlane.f32.xlu0 %v1135
    %v1137 = vpop.xlane.xlu0 %1136
    %v1138 = vsel %vm49, %v1134, 0.0
    %1139 = vadd.xlane.f32.xlu0 %v1138
    %v1140 = vpop.xlane.xlu0 %1139
    %v1141 = vmul.f32 %v1137, %v56
    %v1142 = vmul.f32 %v1140, %v56
    %v1143 = vadd.f32 %v1141, 1e-05
    %v1144 = vadd.f32 %v1142, 1e-05
    %v1145 = vrsqrt.pop %v1143
    %v1146 = vrsqrt.pop %v1144
    %v1147 = vmul.f32 %v1131, %v1145
    %v1148 = vmul.f32 %v1132, %v1146
    %v1149 = vlaneseq
    %v1150 = vshrl.u32 %v1149, 7
    %v1151 = vsub.s32 0, %v1150
    %v1152 = vrot.slane %v47, %v1151
    %v1153 = vmul.f32 %v1147, %v1152
    %v1154 = vmul.f32 %v1148, %v1152
    %v1155 = vlaneseq
    %v1156 = vshrl.u32 %v1155, 7
    %v1157 = vsub.s32 0, %v1156
    %v1158 = vrot.slane %v48, %v1157
    %v1159 = vadd.f32 %v1153, %v1158
    %v1160 = vadd.f32 %v1154, %v1158
    %v1161 = vld [vmem:[%s3] sm:$0xff]
    %v1162 = vld [vmem:[%s3 + $0x8] sm:$0xff]
    %v1163 = vld [vmem:[%s3 + $0x10] sm:$0xff]
    %v1164 = vld [vmem:[%s3 + $0x18] sm:$0xff]
    %v1166 = vlaneseq
    %v1167 = vshrl.u32 %v1166, 7
    %v1168 = vsub.s32 0, %v1167
    %v1169 = vrot.slane %v44, %v1168
    %v1172 = vsel %vm49, %v1159, 0
    %v1175 = vsel %vm49, %v1160, 0
    %1177 = vmatprep.subr.mxu0 0.0
    %1178 = vmatpush1.msra.mxu0 %v1161
    %1179 = vmatprep.subr.mxu0 0.0
    %1180 = vmatpush1.msra.mxu0 %v1162
    %1181 = vmatprep.subr.mxu0 0.0
    %1182 = vmatpush1.msra.mxu0 %v1163
    %1183 = vmatprep.subr.mxu0 0.0
    %1184 = vmatpush1.msra.mxu0 %v1164
    %1185 = vmatprep.subr.mxu0 0.0
    %1186 = vmatpush1.msra.mxu0 0.0
    %1187 = vmatprep.subr.mxu0 0.0
    %1188 = vmatpush1.msra.mxu0 0.0
    %1189 = vmatprep.subr.mxu0 0.0
    %1190 = vmatpush1.msra.mxu0 0.0
    %1191 = vmatprep.subr.mxu0 0.0
    %1192 = vmatpush1.msra.mxu0 0.0
    %1193 = vmatprep.subr.mxu0 0.0
    %1194 = vmatpush1.msra.mxu0 0.0
    %1195 = vmatprep.subr.mxu0 0.0
    %1196 = vmatpush1.msra.mxu0 0.0
    %1197 = vmatprep.subr.mxu0 0.0
    %1198 = vmatpush1.msra.mxu0 0.0
    %1199 = vmatprep.subr.mxu0 0.0
    %1200 = vmatpush1.msra.mxu0 0.0
    %1201 = vmatprep.subr.mxu0 0.0
    %1202 = vmatpush1.msra.mxu0 0.0
    %1203 = vmatprep.subr.mxu0 0.0
    %1204 = vmatpush1.msra.mxu0 0.0
    %1205 = vmatprep.subr.mxu0 0.0
    %1206 = vmatpush1.msra.mxu0 0.0
    %1207 = vmatprep.subr.mxu0 0.0
    %1208 = vmatpush1.msra.mxu0 0.0
    %1209 = vmatprep.subr.mxu0 0.0
    %1210 = vmatpush1.msra.mxu0 0.0
    %1211 = vmatprep.subr.mxu0 0.0
    %1212 = vmatpush1.msra.mxu0 0.0
    %1213 = vmatprep.subr.mxu0 0.0
    %1214 = vmatpush1.msra.mxu0 0.0
    %1215 = vmatprep.subr.mxu0 0.0
    %1216 = vmatpush1.msra.mxu0 0.0
    %1217 = vmatprep.subr.mxu0 0.0
    %1218 = vmatpush1.msra.mxu0 0.0
    %1219 = vmatprep.subr.mxu0 0.0
    %1220 = vmatpush1.msra.mxu0 0.0
    %1221 = vmatprep.subr.mxu0 0.0
    %1222 = vmatpush1.msra.mxu0 0.0
    %1223 = vmatprep.subr.mxu0 0.0
    %1224 = vmatpush1.msra.mxu0 0.0
    %1225 = vmatprep.subr.mxu0 0.0
    %1226 = vmatpush1.msra.mxu0 0.0
    %1227 = vmatprep.subr.mxu0 0.0
    %1228 = vmatpush1.msra.mxu0 0.0
    %1229 = vmatprep.subr.mxu0 0.0
    %1230 = vmatpush1.msra.mxu0 0.0
    %1231 = vmatprep.subr.mxu0 0.0
    %1232 = vmatpush1.msra.mxu0 0.0
    %1233 = vmatprep.subr.mxu0 0.0
    %1234 = vmatpush1.msra.mxu0 0.0
    %1235 = vmatprep.subr.mxu0 0.0
    %1236 = vmatpush1.msra.mxu0 0.0
    %1237 = vmatprep.subr.mxu0 0.0
    %1238 = vmatpush1.msra.mxu0 0.0
    %1239 = vmatprep.subr.mxu0 0.0
    %1240 = vmatpush1.msra.mxu0 0.0
    %1241 = vmatprep.mubr.f32.mxu0 0.0
    %1242 = vmatmul.mubr.f32.gmra.mrb[0].mxu0 %v1172
    %v1243 = vpop.f32.mrb[0].mxu0
    %v1244 = vadd.f32 %v1169, %v1243
    %v1245 = vpop.f32.mrb[0].mxu0
    %1246 = vmatprep.mubr.f32.mxu0 0.0
    %1247 = vmatmul.mubr.f32.gmra.mrb[0].mxu0 %v1175
    %v1248 = vpop.f32.mrb[0].mxu0
    %v1249 = vadd.f32 %v1169, %v1248
    %v1250 = vpop.f32.mrb[0].mxu0
    %1251 = vdwg.mxu0
    %v1252 = vmax.f32 %v1244, 0.0
    %v1253 = vmax.f32 %v1249, 0.0
    %v1254 = vld [vmem:[%s4] sm:$0xff]
    %v1255 = vld [vmem:[%s4 + $0x8] sm:$0xff]
    %v1256 = vld [vmem:[%s4 + $0x10] sm:$0xff]
    %v1257 = vld [vmem:[%s4 + $0x18] sm:$0xff]
    %v1258 = vld [vmem:[%s4 + $0x20] sm:$0xff]
    %v1259 = vld [vmem:[%s4 + $0x28] sm:$0xff]
    %v1260 = vld [vmem:[%s4 + $0x30] sm:$0xff]
    %v1261 = vld [vmem:[%s4 + $0x38] sm:$0xff]
    %1262 = vrot.lane.b32.xlu0 %v1169, 64
    %v1263 = vpop.permute.xlu0 %1262
    %vm1265 = vcmask 523264
    %v1267 = vsel %vm1265, %v1252, 0
    %v1270 = vsel %vm1265, %v1253, 0
    %1272 = vmatprep.subr.mxu0 0.0
    %1273 = vmatpush1.msra.mxu0 %v1254
    %1274 = vmatprep.subr.mxu0 0.0
    %1275 = vmatpush1.msra.mxu0 %v1255
    %1276 = vmatprep.subr.mxu0 0.0
    %1277 = vmatpush1.msra.mxu0 %v1256
    %1278 = vmatprep.subr.mxu0 0.0
    %1279 = vmatpush1.msra.mxu0 %v1257
    %1280 = vmatprep.subr.mxu0 0.0
    %1281 = vmatpush1.msra.mxu0 %v1258
    %1282 = vmatprep.subr.mxu0 0.0
    %1283 = vmatpush1.msra.mxu0 %v1259
    %1284 = vmatprep.subr.mxu0 0.0
    %1285 = vmatpush1.msra.mxu0 %v1260
    %1286 = vmatprep.subr.mxu0 0.0
    %1287 = vmatpush1.msra.mxu0 %v1261
    %1288 = vmatprep.subr.mxu0 0.0
    %1289 = vmatpush1.msra.mxu0 0.0
    %1290 = vmatprep.subr.mxu0 0.0
    %1291 = vmatpush1.msra.mxu0 0.0
    %1292 = vmatprep.subr.mxu0 0.0
    %1293 = vmatpush1.msra.mxu0 0.0
    %1294 = vmatprep.subr.mxu0 0.0
    %1295 = vmatpush1.msra.mxu0 0.0
    %1296 = vmatprep.subr.mxu0 0.0
    %1297 = vmatpush1.msra.mxu0 0.0
    %1298 = vmatprep.subr.mxu0 0.0
    %1299 = vmatpush1.msra.mxu0 0.0
    %1300 = vmatprep.subr.mxu0 0.0
    %1301 = vmatpush1.msra.mxu0 0.0
    %1302 = vmatprep.subr.mxu0 0.0
    %1303 = vmatpush1.msra.mxu0 0.0
    %1304 = vmatprep.subr.mxu0 0.0
    %1305 = vmatpush1.msra.mxu0 0.0
    %1306 = vmatprep.subr.mxu0 0.0
    %1307 = vmatpush1.msra.mxu0 0.0
    %1308 = vmatprep.subr.mxu0 0.0
    %1309 = vmatpush1.msra.mxu0 0.0
    %1310 = vmatprep.subr.mxu0 0.0
    %1311 = vmatpush1.msra.mxu0 0.0
    %1312 = vmatprep.subr.mxu0 0.0
    %1313 = vmatpush1.msra.mxu0 0.0
    %1314 = vmatprep.subr.mxu0 0.0
    %1315 = vmatpush1.msra.mxu0 0.0
    %1316 = vmatprep.subr.mxu0 0.0
    %1317 = vmatpush1.msra.mxu0 0.0
    %1318 = vmatprep.subr.mxu0 0.0
    %1319 = vmatpush1.msra.mxu0 0.0
    %1320 = vmatprep.subr.mxu0 0.0
    %1321 = vmatpush1.msra.mxu0 0.0
    %1322 = vmatprep.subr.mxu0 0.0
    %1323 = vmatpush1.msra.mxu0 0.0
    %1324 = vmatprep.subr.mxu0 0.0
    %1325 = vmatpush1.msra.mxu0 0.0
    %1326 = vmatprep.subr.mxu0 0.0
    %1327 = vmatpush1.msra.mxu0 0.0
    %1328 = vmatprep.subr.mxu0 0.0
    %1329 = vmatpush1.msra.mxu0 0.0
    %1330 = vmatprep.subr.mxu0 0.0
    %1331 = vmatpush1.msra.mxu0 0.0
    %1332 = vmatprep.subr.mxu0 0.0
    %1333 = vmatpush1.msra.mxu0 0.0
    %1334 = vmatprep.subr.mxu0 0.0
    %1335 = vmatpush1.msra.mxu0 0.0
    %1336 = vmatprep.mubr.f32.mxu0 0.0
    %1337 = vmatmul.mubr.f32.gmra.mrb[0].mxu0 %v1267
    %v1338 = vpop.f32.mrb[0].mxu0
    %v1339 = vadd.f32 %v1263, %v1338
    %v1340 = vpop.f32.mrb[0].mxu0
    %1341 = vmatprep.mubr.f32.mxu0 0.0
    %1342 = vmatmul.mubr.f32.gmra.mrb[0].mxu0 %v1270
    %v1343 = vpop.f32.mrb[0].mxu0
    %v1344 = vadd.f32 %v1263, %v1343
    %v1345 = vpop.f32.mrb[0].mxu0
    %1346 = vdwg.mxu0
    %v1347 = vadd.f32 %v1121, %v1339
    %v1348 = vadd.f32 %v1122, %v1344
    %1349 = vst.msk [vmem:[#allocation5] sm:$0xff] %vm49, %v1347
    %1350 = vst.msk [vmem:[#allocation5 + $0x8] sm:$0xff] %vm49, %v1348
    %1351 = vrot.lane.b32.xlu0 %v513, 16
    %v1352 = vpop.permute.xlu0 %1351
    %1353 = vrot.lane.b32.xlu0 %v514, 16
    %v1354 = vpop.permute.xlu0 %1353
    %1357 = vrot.lane.b32.xlu0 %v713, 32
    %v1358 = vpop.permute.xlu0 %1357
    %1359 = vrot.lane.b32.xlu0 %v714, 32
    %v1360 = vpop.permute.xlu0 %1359
    %1363 = vrot.lane.b32.xlu0 %v913, 48
    %v1364 = vpop.permute.xlu0 %1363
    %1365 = vrot.lane.b32.xlu0 %v914, 48
    %v1366 = vpop.permute.xlu0 %1365
    %v1369 = vsel %vm292, %v313, %v1352
    %v1370 = vsel %vm292, %v314, %v1354
    %v1371 = vsel %vm49, %v1369, %v1358
    %v1372 = vsel %vm49, %v1370, %v1360
    %vm1373 = vcmask 392192
    %v1374 = vsel %vm1373, %v1371, %v1364
    %v1375 = vsel %vm1373, %v1372, %v1366
    %1376 = vst.msk [vmem:[%s8] sm:$0xff] %vm1265, %v1374
    %1377 = vst.msk [vmem:[%s8 + $0x8] sm:$0xff] %vm1265, %v1375
    // Predicated region
    $region34: #{encoder_layer.1} parent=1 // pred_check
      _
    $region35: #{encoder_layer.1} parent=1 // pred_check_branch
      %1379 = sbr.rel (0) target = $region37
    $region36: #{encoder_layer.1} parent=1 // pred_region
      %s1381 = ssub.s32 256, 256
      %1382 = vsyncadd [#allocation4], %s1381
      %s1383 = sshll.u32 [#allocation5], 4
      %s1384 = int_to_ptr.vmem [resolvable:$true] %s1383
      %1389 = dma.vmem_to_hbm [thread:$0]  %s1384, 256, %s7, [#allocation4], 128, 128, 8
    $region37: #{encoder_layer.1} parent=1 // pred_fallthru
      _
    // Predicated region
    $region38: #{encoder_layer.1} parent=1 // pred_check
      _
    $region39: #{encoder_layer.1} parent=1 // pred_check_branch
      %1391 = sbr.rel (0) target = $region41
    $region40: #{encoder_layer.1} parent=1 // pred_region
      _
    $region41: #{encoder_layer.1} parent=1 // pred_fallthru
      _
    // Predicated region
    $region42: #{encoder_layer.1} parent=1 // pred_check
      _
    $region43: #{encoder_layer.1} parent=1 // pred_check_branch
      %1393 = sbr.rel (0) target = $region45
    $region44: #{encoder_layer.1} parent=1 // pred_region
      %1394 = dma.done [#allocation4], 256
    $region45: #{encoder_layer.1} parent=1 // pred_fallthru
      _
    // Predicated region
    $region46: #{encoder_layer.1} parent=1 // pred_check
      _
    $region47: #{encoder_layer.1} parent=1 // pred_check_branch
      %1396 = sbr.rel (0) target = $region49
    $region48: #{encoder_layer.1} parent=1 // pred_region
      _
    $region49: #{encoder_layer.1} parent=1 // pred_fallthru
      _
    %1397 = vsyncpa [#allocation3], 1
    %1398 = vsyncpa [#allocation4], 1

</llo_original>
